<compile_context>
chip_gen: v6e
topology: v6e:2x2x1
jax: 0.10.0
libtpu: 0.0.40
codegen_flags: <defaults>
</compile_context>

<pallas_src>
import math

import jax
import jax.numpy as jnp
from jax import lax
from jax.experimental import pallas as pl
from jax.experimental.pallas import tpu as pltpu

# ---- small, module-consistent config ----
B = 2            # batch
C_IN = 4         # input_dim
S = 8            # seq_length
D = 32           # hidden_dim (d_model)
H = 4            # nhead
DH = D // H      # head dim
FF = 2 * D       # dim_feedforward = hidden_dim * 2
L = 2            # num_layers
BS = B * S       # flattened (batch, seq) rows
HL = H * BS      # score lanes: H head-blocks of BS key columns each
EPS = 1e-5       # nn.LayerNorm default eps
NEG = -1e30      # additive mask for cross-batch keys (exp underflows to 0)


def _layernorm(h, w, b):
    mu = jnp.mean(h, axis=-1, keepdims=True)
    var = jnp.mean((h - mu) ** 2, axis=-1, keepdims=True)
    return (h - mu) * lax.rsqrt(var + EPS) * w + b


def transformer_kernel(x_ref, pe_ref, emb_w_ref, emb_b_ref, ln0_w_ref, ln0_b_ref,
                       qkv_w_ref, qkv_b_ref, out_w_ref, out_b_ref,
                       ln1_w_ref, ln1_b_ref, ff1_w_ref, ff1_b_ref,
                       ff2_w_ref, ff2_b_ref, ln2_w_ref, ln2_b_ref,
                       fc_w_ref, fc_b_ref,
                       hmask_ref, amask_ref, gmat_ref, pool_ref,
                       o_ref):
    # ---- embedding + positional encoding + pre-encoder LayerNorm ----
    h = (jnp.dot(x_ref[...], emb_w_ref[...], preferred_element_type=jnp.float32)
         + emb_b_ref[...] + pe_ref[...])                          # (BS, D)
    h = _layernorm(h, ln0_w_ref[...], ln0_b_ref[...])

    hmask = hmask_ref[...]      # (HL, D)  1 iff row's head-block == lane's head
    amask = amask_ref[...]      # (BS, HL) 0 if same batch else -1e30
    gmat = gmat_ref[...]        # (HL, HL) 1 iff same head-block (group sum)

    # ---- encoder layers (post-LN, dropout = identity at inference) ----
    for l in range(L):          # static unroll; all weights already resident
        qkv = (jnp.dot(h, qkv_w_ref[l], preferred_element_type=jnp.float32)
               + qkv_b_ref[l])                                    # (BS, 3D)
        q = qkv[:, :D]          # 1/sqrt(DH) already folded into Wq / bq
        k = qkv[:, D:2 * D]
        v = qkv[:, 2 * D:]

        # Block-diagonal K/V: row h*BS + c holds key/value row c, restricted
        # to head h's DH lanes.  One matmul then scores/contracts every head.
        kb = jnp.concatenate([k] * H, axis=0) * hmask             # (HL, D)
        vb = jnp.concatenate([v] * H, axis=0) * hmask             # (HL, D)

        s = jnp.einsum('rd,cd->rc', q, kb,
                       preferred_element_type=jnp.float32)        # (BS, HL)
        s = s + amask                                             # kill cross-batch keys
        s = s - jnp.max(s, axis=-1, keepdims=True)                # row-constant shift
        p = jnp.exp(s)                                            # masked cols -> exactly 0
        # Per-head denominator broadcast to every lane of its head block.
        denom = jnp.dot(p, gmat, preferred_element_type=jnp.float32)
        attn = p * pl.reciprocal(denom, approx=True)
        ctx = jnp.dot(attn, vb, preferred_element_type=jnp.float32)   # (BS, D)

        sa = (jnp.dot(ctx, out_w_ref[l], preferred_element_type=jnp.float32)
              + out_b_ref[l])
        h = _layernorm(h + sa, ln1_w_ref[l], ln1_b_ref[l])

        ff = jnp.maximum(jnp.dot(h, ff1_w_ref[l], preferred_element_type=jnp.float32)
                         + ff1_b_ref[l], 0.0)
        ff = jnp.dot(ff, ff2_w_ref[l], preferred_element_type=jnp.float32) + ff2_b_ref[l]
        h = _layernorm(h + ff, ln2_w_ref[l], ln2_b_ref[l])

    # ---- mean pool over sequence (tiny matmul, 1/S folded in), fc, sigmoid ----
    pooled = jnp.dot(pool_ref[...], h, preferred_element_type=jnp.float32)   # (B, D)
    logit = (jnp.dot(pooled, fc_w_ref[...], preferred_element_type=jnp.float32)
             + fc_b_ref[...])
    o_ref[...] = jax.nn.sigmoid(logit)                            # (B, 1)


def transformer_classifier(x_bcs, p):
    """x_bcs: (B, input_dim, S) like the PyTorch module input.  Returns (B,)."""
    # Layout plumbing stays in XLA: NCL -> NLC -> (BS, C_IN); PE pre-broadcast.
    x2d = jnp.transpose(x_bcs, (0, 2, 1)).astype(jnp.float32).reshape(BS, C_IN)
    pe2d = jnp.broadcast_to(p['pe'][None], (B, S, D)).reshape(BS, D)

    # Fold the 1/sqrt(head_dim) attention scale into the Q projection.
    scale = 1.0 / math.sqrt(DH)
    qkv_w = p['qkv_w'].at[:, :, :D].multiply(scale)
    qkv_b = p['qkv_b'].at[:, :, :D].multiply(scale)

    # Precomputed selector masks for the block-diagonal all-head attention.
    head_of_dim = jnp.arange(D) // DH             # (D,)   lane -> head
    head_of_col = jnp.arange(HL) // BS            # (HL,)  score lane -> head
    row_of_col = jnp.arange(HL) % BS              # (HL,)  score lane -> key row (b,k)
    batch_of_col = row_of_col // S                # (HL,)
    batch_of_row = jnp.arange(BS) // S            # (BS,)
    f32 = jnp.float32
    hmask = (head_of_col[:, None] == head_of_dim[None, :]).astype(f32)      # (HL, D)
    amask = jnp.where(batch_of_row[:, None] == batch_of_col[None, :],
                      0.0, NEG).astype(f32)                                  # (BS, HL)
    gmat = (head_of_col[:, None] == head_of_col[None, :]).astype(f32)        # (HL, HL)
    pool = ((jnp.arange(B)[:, None] == batch_of_row[None, :]).astype(f32)
            * (1.0 / S))                                                      # (B, BS)

    in_arrays = [x2d, pe2d, p['emb_w'], p['emb_b'], p['ln0_w'], p['ln0_b'],
                 qkv_w, qkv_b, p['out_w'], p['out_b'],
                 p['ln1_w'], p['ln1_b'], p['ff1_w'], p['ff1_b'],
                 p['ff2_w'], p['ff2_b'], p['ln2_w'], p['ln2_b'],
                 p['fc_w'], p['fc_b'],
                 hmask, amask, gmat, pool]

    out = pl.pallas_call(
        transformer_kernel,
        out_shape=jax.ShapeDtypeStruct((B, 1), jnp.float32),
        in_specs=[pl.BlockSpec(memory_space=pltpu.MemorySpace.VMEM)
                  for _ in in_arrays],
        out_specs=pl.BlockSpec(memory_space=pltpu.MemorySpace.VMEM),
    )(*in_arrays)
    return out[:, 0]    # == .squeeze() for B > 1


def init_params(key):
    ks = iter(jax.random.split(key, 24))

    def n(shape, scale=0.1):
        return (scale * jax.random.normal(next(ks), shape)).astype(jnp.float32)

    ones = lambda s: jnp.ones(s, jnp.float32)
    zeros = lambda s: jnp.zeros(s, jnp.float32)
    return dict(
        emb_w=n((C_IN, D)), emb_b=n((1, D)),
        # module init is zeros; random here to exercise the add path
        pe=n((S, D)),
        ln0_w=ones((1, D)), ln0_b=zeros((1, D)),
        qkv_w=n((L, D, 3 * D)), qkv_b=n((L, 1, 3 * D)),
        out_w=n((L, D, D)), out_b=n((L, 1, D)),
        ln1_w=ones((L, 1, D)), ln1_b=zeros((L, 1, D)),
        ff1_w=n((L, D, FF)), ff1_b=n((L, 1, FF)),
        ff2_w=n((L, FF, D)), ff2_b=n((L, 1, D)),
        ln2_w=ones((L, 1, D)), ln2_b=zeros((L, 1, D)),
        fc_w=n((D, 1)), fc_b=n((1, 1)),
    )


def reference(x_bcs, p):
    """Pure-JAX mirror of the PyTorch forward (eval mode)."""
    h = jnp.transpose(x_bcs, (0, 2, 1)) @ p['emb_w'] + p['emb_b'] + p['pe']
    h = _layernorm(h, p['ln0_w'], p['ln0_b'])
    for l in range(L):
        qkv = h @ p['qkv_w'][l] + p['qkv_b'][l]
        q, k, v = jnp.split(qkv, 3, axis=-1)
        q = q.reshape(B, S, H, DH)
        k = k.reshape(B, S, H, DH)
        v = v.reshape(B, S, H, DH)
        sc = jnp.einsum('bqhd,bkhd->bhqk', q, k) / math.sqrt(DH)
        attn = jax.nn.softmax(sc, axis=-1)
        ctx = jnp.einsum('bhqk,bkhd->bqhd', attn, v).reshape(B, S, D)
        sa = ctx @ p['out_w'][l] + p['out_b'][l]
        h = _layernorm(h + sa, p['ln1_w'][l], p['ln1_b'][l])
        ff = jax.nn.relu(h @ p['ff1_w'][l] + p['ff1_b'][l]) @ p['ff2_w'][l] + p['ff2_b'][l]
        h = _layernorm(h + ff, p['ln2_w'][l], p['ln2_b'][l])
    pooled = h.mean(axis=1)
    return jax.nn.sigmoid(pooled @ p['fc_w'] + p['fc_b'])[:, 0]


if __name__ == "__main__":
    key = jax.random.PRNGKey(0)
    kx, kp = jax.random.split(key)
    x = jax.random.normal(kx, (B, C_IN, S), dtype=jnp.float32)   # (B, input_dim, seq)
    params = init_params(kp)

    out = jax.block_until_ready(transformer_classifier(x, params))
    ref = reference(x, params)

    assert out.shape == (B,)
    # approx EUP reciprocal in the softmax => slightly looser tolerance than exact.
    if not jnp.allclose(out, ref, atol=5e-3, rtol=5e-3):
        raise AssertionError(f"kernel/reference mismatch: {out} vs {ref}")
    # TODO(synk): dropout layers are treated as inference-mode identities.
    print("KERNEL_OK")
</pallas_src>

<mosaic_0001>
module attributes {stable_mosaic.version = 11 : i64} {
  func.func @transformer_kernel(%arg0: memref<16x4xf32, #tpu.memory_space<vmem>>, %arg1: memref<16x32xf32, #tpu.memory_space<vmem>>, %arg2: memref<4x32xf32, #tpu.memory_space<vmem>>, %arg3: memref<1x32xf32, #tpu.memory_space<vmem>>, %arg4: memref<1x32xf32, #tpu.memory_space<vmem>>, %arg5: memref<1x32xf32, #tpu.memory_space<vmem>>, %arg6: memref<2x32x96xf32, #tpu.memory_space<vmem>>, %arg7: memref<2x1x96xf32, #tpu.memory_space<vmem>>, %arg8: memref<2x32x32xf32, #tpu.memory_space<vmem>>, %arg9: memref<2x1x32xf32, #tpu.memory_space<vmem>>, %arg10: memref<2x1x32xf32, #tpu.memory_space<vmem>>, %arg11: memref<2x1x32xf32, #tpu.memory_space<vmem>>, %arg12: memref<2x32x64xf32, #tpu.memory_space<vmem>>, %arg13: memref<2x1x64xf32, #tpu.memory_space<vmem>>, %arg14: memref<2x64x32xf32, #tpu.memory_space<vmem>>, %arg15: memref<2x1x32xf32, #tpu.memory_space<vmem>>, %arg16: memref<2x1x32xf32, #tpu.memory_space<vmem>>, %arg17: memref<2x1x32xf32, #tpu.memory_space<vmem>>, %arg18: memref<32x1xf32, #tpu.memory_space<vmem>>, %arg19: memref<1x1xf32, #tpu.memory_space<vmem>>, %arg20: memref<64x32xf32, #tpu.memory_space<vmem>>, %arg21: memref<16x64xf32, #tpu.memory_space<vmem>>, %arg22: memref<64x64xf32, #tpu.memory_space<vmem>>, %arg23: memref<2x16xf32, #tpu.memory_space<vmem>>, %arg24: memref<2x1xf32, #tpu.memory_space<vmem>>) attributes {dimension_semantics = [], scalar_prefetch = 0 : i64, scratch_operands = 0 : i64, tpu.core_type = #tpu.core_type<tc>} {
    %c0 = arith.constant 0 : index
    %c0_0 = arith.constant 0 : index
    %0 = vector.load %arg0[%c0, %c0_0] : memref<16x4xf32, #tpu.memory_space<vmem>>, vector<16x4xf32>
    %c0_1 = arith.constant 0 : index
    %c0_2 = arith.constant 0 : index
    %1 = vector.load %arg2[%c0_1, %c0_2] : memref<4x32xf32, #tpu.memory_space<vmem>>, vector<4x32xf32>
    %cst = arith.constant dense<0.000000e+00> : vector<16x32xf32>
    %2 = tpu.matmul %0, %1, %cst {dimension_numbers = #tpu.dot_dimension_numbers<[1], [0], [0], [1], [0, 0, 1, 1], [], []>} : vector<16x4xf32>, vector<4x32xf32>, vector<16x32xf32> -> vector<16x32xf32>
    %c0_3 = arith.constant 0 : index
    %c0_4 = arith.constant 0 : index
    %3 = vector.load %arg3[%c0_3, %c0_4] : memref<1x32xf32, #tpu.memory_space<vmem>>, vector<1x32xf32>
    %4 = vector.broadcast %3 : vector<1x32xf32> to vector<16x32xf32>
    %5 = arith.addf %2, %4 : vector<16x32xf32>
    %c0_5 = arith.constant 0 : index
    %c0_6 = arith.constant 0 : index
    %6 = vector.load %arg1[%c0_5, %c0_6] : memref<16x32xf32, #tpu.memory_space<vmem>>, vector<16x32xf32>
    %7 = arith.addf %5, %6 : vector<16x32xf32>
    %c0_7 = arith.constant 0 : index
    %c0_8 = arith.constant 0 : index
    %8 = vector.load %arg4[%c0_7, %c0_8] : memref<1x32xf32, #tpu.memory_space<vmem>>, vector<1x32xf32>
    %c0_9 = arith.constant 0 : index
    %c0_10 = arith.constant 0 : index
    %9 = vector.load %arg5[%c0_9, %c0_10] : memref<1x32xf32, #tpu.memory_space<vmem>>, vector<1x32xf32>
    %cst_11 = arith.constant dense<0.000000e+00> : vector<16xf32>
    %10 = vector.multi_reduction <add>, %7, %cst_11 [1] : vector<16x32xf32> to vector<16xf32>
    %11 = vector.shape_cast %10 : vector<16xf32> to vector<16x1xf32>
    %cst_12 = arith.constant 3.200000e+01 : f32
    %12 = vector.broadcast %cst_12 : f32 to vector<16x1xf32>
    %13 = arith.divf %11, %12 : vector<16x1xf32>
    %14 = vector.broadcast %13 : vector<16x1xf32> to vector<16x32xf32>
    %15 = arith.subf %7, %14 : vector<16x32xf32>
    %16 = arith.mulf %15, %15 : vector<16x32xf32>
    %cst_13 = arith.constant dense<0.000000e+00> : vector<16xf32>
    %17 = vector.multi_reduction <add>, %16, %cst_13 [1] : vector<16x32xf32> to vector<16xf32>
    %18 = vector.shape_cast %17 : vector<16xf32> to vector<16x1xf32>
    %cst_14 = arith.constant 3.200000e+01 : f32
    %19 = vector.broadcast %cst_14 : f32 to vector<16x1xf32>
    %20 = arith.divf %18, %19 : vector<16x1xf32>
    %21 = vector.broadcast %13 : vector<16x1xf32> to vector<16x32xf32>
    %22 = arith.subf %7, %21 : vector<16x32xf32>
    %cst_15 = arith.constant 9.99999974E-6 : f32
    %23 = vector.broadcast %cst_15 : f32 to vector<16x1xf32>
    %24 = arith.addf %20, %23 : vector<16x1xf32>
    %25 = math.rsqrt %24 : vector<16x1xf32>
    %26 = vector.broadcast %25 : vector<16x1xf32> to vector<16x32xf32>
    %27 = arith.mulf %22, %26 : vector<16x32xf32>
    %28 = vector.broadcast %8 : vector<1x32xf32> to vector<16x32xf32>
    %29 = arith.mulf %27, %28 : vector<16x32xf32>
    %30 = vector.broadcast %9 : vector<1x32xf32> to vector<16x32xf32>
    %31 = arith.addf %29, %30 : vector<16x32xf32>
    %c0_16 = arith.constant 0 : index
    %c0_17 = arith.constant 0 : index
    %32 = vector.load %arg20[%c0_16, %c0_17] : memref<64x32xf32, #tpu.memory_space<vmem>>, vector<64x32xf32>
    %c0_18 = arith.constant 0 : index
    %c0_19 = arith.constant 0 : index
    %33 = vector.load %arg21[%c0_18, %c0_19] : memref<16x64xf32, #tpu.memory_space<vmem>>, vector<16x64xf32>
    %c0_20 = arith.constant 0 : index
    %c0_21 = arith.constant 0 : index
    %34 = vector.load %arg22[%c0_20, %c0_21] : memref<64x64xf32, #tpu.memory_space<vmem>>, vector<64x64xf32>
    %c0_22 = arith.constant 0 : index
    %c0_23 = arith.constant 0 : index
    %c0_24 = arith.constant 0 : index
    %35 = vector.load %arg6[%c0_22, %c0_23, %c0_24] : memref<2x32x96xf32, #tpu.memory_space<vmem>>, vector<1x32x96xf32>
    %36 = vector.shape_cast %35 : vector<1x32x96xf32> to vector<32x96xf32>
    %cst_25 = arith.constant dense<0.000000e+00> : vector<16x96xf32>
    %37 = tpu.matmul %31, %36, %cst_25 {dimension_numbers = #tpu.dot_dimension_numbers<[1], [0], [0], [1], [0, 0, 1, 1], [], []>} : vector<16x32xf32>, vector<32x96xf32>, vector<16x96xf32> -> vector<16x96xf32>
    %c0_26 = arith.constant 0 : index
    %c0_27 = arith.constant 0 : index
    %c0_28 = arith.constant 0 : index
    %38 = vector.load %arg7[%c0_26, %c0_27, %c0_28] : memref<2x1x96xf32, #tpu.memory_space<vmem>>, vector<1x1x96xf32>
    %39 = vector.shape_cast %38 : vector<1x1x96xf32> to vector<1x96xf32>
    %40 = vector.broadcast %39 : vector<1x96xf32> to vector<16x96xf32>
    %41 = arith.addf %37, %40 : vector<16x96xf32>
    %42 = vector.extract_strided_slice %41 {offsets = [0, 0], sizes = [16, 32], strides = [1, 1]} : vector<16x96xf32> to vector<16x32xf32>
    %43 = vector.extract_strided_slice %41 {offsets = [0, 32], sizes = [16, 32], strides = [1, 1]} : vector<16x96xf32> to vector<16x32xf32>
    %44 = vector.extract_strided_slice %41 {offsets = [0, 64], sizes = [16, 32], strides = [1, 1]} : vector<16x96xf32> to vector<16x32xf32>
    %45 = tpu.concatenate %43, %43, %43, %43 in 0 : vector<16x32xf32>, vector<16x32xf32>, vector<16x32xf32>, vector<16x32xf32> -> vector<64x32xf32>
    %46 = arith.mulf %45, %32 : vector<64x32xf32>
    %47 = tpu.concatenate %44, %44, %44, %44 in 0 : vector<16x32xf32>, vector<16x32xf32>, vector<16x32xf32>, vector<16x32xf32> -> vector<64x32xf32>
    %48 = arith.mulf %47, %32 : vector<64x32xf32>
    "tpu.trace_start"() <{level = 10 : i32, message = "rd,cd->rc"}> : () -> ()
    %cst_29 = arith.constant dense<0.000000e+00> : vector<16x64xf32>
    %49 = tpu.matmul %42, %46, %cst_29 {dimension_numbers = #tpu.dot_dimension_numbers<[1], [1], [0], [0], [0, 0, 1, 0], [], []>} : vector<16x32xf32>, vector<64x32xf32>, vector<16x64xf32> -> vector<16x64xf32>
    "tpu.trace_stop"() : () -> ()
    %50 = arith.addf %49, %33 : vector<16x64xf32>
    %cst_30 = arith.constant dense<0xFF800000> : vector<16xf32>
    %51 = vector.multi_reduction <maximumf>, %50, %cst_30 [1] : vector<16x64xf32> to vector<16xf32>
    %52 = vector.shape_cast %51 : vector<16xf32> to vector<16x1xf32>
    %53 = vector.broadcast %52 : vector<16x1xf32> to vector<16x64xf32>
    %54 = arith.subf %50, %53 : vector<16x64xf32>
    %55 = math.exp %54 : vector<16x64xf32>
    %cst_31 = arith.constant dense<0.000000e+00> : vector<16x64xf32>
    %56 = tpu.matmul %55, %34, %cst_31 {dimension_numbers = #tpu.dot_dimension_numbers<[1], [0], [0], [1], [0, 0, 1, 1], [], []>} : vector<16x64xf32>, vector<64x64xf32>, vector<16x64xf32> -> vector<16x64xf32>
    %57 = tpu.reciprocal %56 {approx = true} : vector<16x64xf32> -> vector<16x64xf32>
    %58 = arith.mulf %55, %57 : vector<16x64xf32>
    %cst_32 = arith.constant dense<0.000000e+00> : vector<16x32xf32>
    %59 = tpu.matmul %58, %48, %cst_32 {dimension_numbers = #tpu.dot_dimension_numbers<[1], [0], [0], [1], [0, 0, 1, 1], [], []>} : vector<16x64xf32>, vector<64x32xf32>, vector<16x32xf32> -> vector<16x32xf32>
    %c0_33 = arith.constant 0 : index
    %c0_34 = arith.constant 0 : index
    %c0_35 = arith.constant 0 : index
    %60 = vector.load %arg8[%c0_33, %c0_34, %c0_35] : memref<2x32x32xf32, #tpu.memory_space<vmem>>, vector<1x32x32xf32>
    %61 = vector.shape_cast %60 : vector<1x32x32xf32> to vector<32x32xf32>
    %cst_36 = arith.constant dense<0.000000e+00> : vector<16x32xf32>
    %62 = tpu.matmul %59, %61, %cst_36 {dimension_numbers = #tpu.dot_dimension_numbers<[1], [0], [0], [1], [0, 0, 1, 1], [], []>} : vector<16x32xf32>, vector<32x32xf32>, vector<16x32xf32> -> vector<16x32xf32>
    %c0_37 = arith.constant 0 : index
    %c0_38 = arith.constant 0 : index
    %c0_39 = arith.constant 0 : index
    %63 = vector.load %arg9[%c0_37, %c0_38, %c0_39] : memref<2x1x32xf32, #tpu.memory_space<vmem>>, vector<1x1x32xf32>
    %64 = vector.shape_cast %63 : vector<1x1x32xf32> to vector<1x32xf32>
    %65 = vector.broadcast %64 : vector<1x32xf32> to vector<16x32xf32>
    %66 = arith.addf %62, %65 : vector<16x32xf32>
    %67 = arith.addf %31, %66 : vector<16x32xf32>
    %c0_40 = arith.constant 0 : index
    %c0_41 = arith.constant 0 : index
    %c0_42 = arith.constant 0 : index
    %68 = vector.load %arg10[%c0_40, %c0_41, %c0_42] : memref<2x1x32xf32, #tpu.memory_space<vmem>>, vector<1x1x32xf32>
    %69 = vector.shape_cast %68 : vector<1x1x32xf32> to vector<1x32xf32>
    %c0_43 = arith.constant 0 : index
    %c0_44 = arith.constant 0 : index
    %c0_45 = arith.constant 0 : index
    %70 = vector.load %arg11[%c0_43, %c0_44, %c0_45] : memref<2x1x32xf32, #tpu.memory_space<vmem>>, vector<1x1x32xf32>
    %71 = vector.shape_cast %70 : vector<1x1x32xf32> to vector<1x32xf32>
    %cst_46 = arith.constant dense<0.000000e+00> : vector<16xf32>
    %72 = vector.multi_reduction <add>, %67, %cst_46 [1] : vector<16x32xf32> to vector<16xf32>
    %73 = vector.shape_cast %72 : vector<16xf32> to vector<16x1xf32>
    %cst_47 = arith.constant 3.200000e+01 : f32
    %74 = vector.broadcast %cst_47 : f32 to vector<16x1xf32>
    %75 = arith.divf %73, %74 : vector<16x1xf32>
    %76 = vector.broadcast %75 : vector<16x1xf32> to vector<16x32xf32>
    %77 = arith.subf %67, %76 : vector<16x32xf32>
    %78 = arith.mulf %77, %77 : vector<16x32xf32>
    %cst_48 = arith.constant dense<0.000000e+00> : vector<16xf32>
    %79 = vector.multi_reduction <add>, %78, %cst_48 [1] : vector<16x32xf32> to vector<16xf32>
    %80 = vector.shape_cast %79 : vector<16xf32> to vector<16x1xf32>
    %cst_49 = arith.constant 3.200000e+01 : f32
    %81 = vector.broadcast %cst_49 : f32 to vector<16x1xf32>
    %82 = arith.divf %80, %81 : vector<16x1xf32>
    %83 = vector.broadcast %75 : vector<16x1xf32> to vector<16x32xf32>
    %84 = arith.subf %67, %83 : vector<16x32xf32>
    %cst_50 = arith.constant 9.99999974E-6 : f32
    %85 = vector.broadcast %cst_50 : f32 to vector<16x1xf32>
    %86 = arith.addf %82, %85 : vector<16x1xf32>
    %87 = math.rsqrt %86 : vector<16x1xf32>
    %88 = vector.broadcast %87 : vector<16x1xf32> to vector<16x32xf32>
    %89 = arith.mulf %84, %88 : vector<16x32xf32>
    %90 = vector.broadcast %69 : vector<1x32xf32> to vector<16x32xf32>
    %91 = arith.mulf %89, %90 : vector<16x32xf32>
    %92 = vector.broadcast %71 : vector<1x32xf32> to vector<16x32xf32>
    %93 = arith.addf %91, %92 : vector<16x32xf32>
    %c0_51 = arith.constant 0 : index
    %c0_52 = arith.constant 0 : index
    %c0_53 = arith.constant 0 : index
    %94 = vector.load %arg12[%c0_51, %c0_52, %c0_53] : memref<2x32x64xf32, #tpu.memory_space<vmem>>, vector<1x32x64xf32>
    %95 = vector.shape_cast %94 : vector<1x32x64xf32> to vector<32x64xf32>
    %cst_54 = arith.constant dense<0.000000e+00> : vector<16x64xf32>
    %96 = tpu.matmul %93, %95, %cst_54 {dimension_numbers = #tpu.dot_dimension_numbers<[1], [0], [0], [1], [0, 0, 1, 1], [], []>} : vector<16x32xf32>, vector<32x64xf32>, vector<16x64xf32> -> vector<16x64xf32>
    %c0_55 = arith.constant 0 : index
    %c0_56 = arith.constant 0 : index
    %c0_57 = arith.constant 0 : index
    %97 = vector.load %arg13[%c0_55, %c0_56, %c0_57] : memref<2x1x64xf32, #tpu.memory_space<vmem>>, vector<1x1x64xf32>
    %98 = vector.shape_cast %97 : vector<1x1x64xf32> to vector<1x64xf32>
    %99 = vector.broadcast %98 : vector<1x64xf32> to vector<16x64xf32>
    %100 = arith.addf %96, %99 : vector<16x64xf32>
    %cst_58 = arith.constant 0.000000e+00 : f32
    %101 = vector.broadcast %cst_58 : f32 to vector<16x64xf32>
    %102 = arith.maximumf %100, %101 : vector<16x64xf32>
    %c0_59 = arith.constant 0 : index
    %c0_60 = arith.constant 0 : index
    %c0_61 = arith.constant 0 : index
    %103 = vector.load %arg14[%c0_59, %c0_60, %c0_61] : memref<2x64x32xf32, #tpu.memory_space<vmem>>, vector<1x64x32xf32>
    %104 = vector.shape_cast %103 : vector<1x64x32xf32> to vector<64x32xf32>
    %cst_62 = arith.constant dense<0.000000e+00> : vector<16x32xf32>
    %105 = tpu.matmul %102, %104, %cst_62 {dimension_numbers = #tpu.dot_dimension_numbers<[1], [0], [0], [1], [0, 0, 1, 1], [], []>} : vector<16x64xf32>, vector<64x32xf32>, vector<16x32xf32> -> vector<16x32xf32>
    %c0_63 = arith.constant 0 : index
    %c0_64 = arith.constant 0 : index
    %c0_65 = arith.constant 0 : index
    %106 = vector.load %arg15[%c0_63, %c0_64, %c0_65] : memref<2x1x32xf32, #tpu.memory_space<vmem>>, vector<1x1x32xf32>
    %107 = vector.shape_cast %106 : vector<1x1x32xf32> to vector<1x32xf32>
    %108 = vector.broadcast %107 : vector<1x32xf32> to vector<16x32xf32>
    %109 = arith.addf %105, %108 : vector<16x32xf32>
    %110 = arith.addf %93, %109 : vector<16x32xf32>
    %c0_66 = arith.constant 0 : index
    %c0_67 = arith.constant 0 : index
    %c0_68 = arith.constant 0 : index
    %111 = vector.load %arg16[%c0_66, %c0_67, %c0_68] : memref<2x1x32xf32, #tpu.memory_space<vmem>>, vector<1x1x32xf32>
    %112 = vector.shape_cast %111 : vector<1x1x32xf32> to vector<1x32xf32>
    %c0_69 = arith.constant 0 : index
    %c0_70 = arith.constant 0 : index
    %c0_71 = arith.constant 0 : index
    %113 = vector.load %arg17[%c0_69, %c0_70, %c0_71] : memref<2x1x32xf32, #tpu.memory_space<vmem>>, vector<1x1x32xf32>
    %114 = vector.shape_cast %113 : vector<1x1x32xf32> to vector<1x32xf32>
    %cst_72 = arith.constant dense<0.000000e+00> : vector<16xf32>
    %115 = vector.multi_reduction <add>, %110, %cst_72 [1] : vector<16x32xf32> to vector<16xf32>
    %116 = vector.shape_cast %115 : vector<16xf32> to vector<16x1xf32>
    %cst_73 = arith.constant 3.200000e+01 : f32
    %117 = vector.broadcast %cst_73 : f32 to vector<16x1xf32>
    %118 = arith.divf %116, %117 : vector<16x1xf32>
    %119 = vector.broadcast %118 : vector<16x1xf32> to vector<16x32xf32>
    %120 = arith.subf %110, %119 : vector<16x32xf32>
    %121 = arith.mulf %120, %120 : vector<16x32xf32>
    %cst_74 = arith.constant dense<0.000000e+00> : vector<16xf32>
    %122 = vector.multi_reduction <add>, %121, %cst_74 [1] : vector<16x32xf32> to vector<16xf32>
    %123 = vector.shape_cast %122 : vector<16xf32> to vector<16x1xf32>
    %cst_75 = arith.constant 3.200000e+01 : f32
    %124 = vector.broadcast %cst_75 : f32 to vector<16x1xf32>
    %125 = arith.divf %123, %124 : vector<16x1xf32>
    %126 = vector.broadcast %118 : vector<16x1xf32> to vector<16x32xf32>
    %127 = arith.subf %110, %126 : vector<16x32xf32>
    %cst_76 = arith.constant 9.99999974E-6 : f32
    %128 = vector.broadcast %cst_76 : f32 to vector<16x1xf32>
    %129 = arith.addf %125, %128 : vector<16x1xf32>
    %130 = math.rsqrt %129 : vector<16x1xf32>
    %131 = vector.broadcast %130 : vector<16x1xf32> to vector<16x32xf32>
    %132 = arith.mulf %127, %131 : vector<16x32xf32>
    %133 = vector.broadcast %112 : vector<1x32xf32> to vector<16x32xf32>
    %134 = arith.mulf %132, %133 : vector<16x32xf32>
    %135 = vector.broadcast %114 : vector<1x32xf32> to vector<16x32xf32>
    %136 = arith.addf %134, %135 : vector<16x32xf32>
    %c1 = arith.constant 1 : index
    %c0_77 = arith.constant 0 : index
    %c0_78 = arith.constant 0 : index
    %137 = vector.load %arg6[%c1, %c0_77, %c0_78] : memref<2x32x96xf32, #tpu.memory_space<vmem>>, vector<1x32x96xf32>
    %138 = vector.shape_cast %137 : vector<1x32x96xf32> to vector<32x96xf32>
    %cst_79 = arith.constant dense<0.000000e+00> : vector<16x96xf32>
    %139 = tpu.matmul %136, %138, %cst_79 {dimension_numbers = #tpu.dot_dimension_numbers<[1], [0], [0], [1], [0, 0, 1, 1], [], []>} : vector<16x32xf32>, vector<32x96xf32>, vector<16x96xf32> -> vector<16x96xf32>
    %c1_80 = arith.constant 1 : index
    %c0_81 = arith.constant 0 : index
    %c0_82 = arith.constant 0 : index
    %140 = vector.load %arg7[%c1_80, %c0_81, %c0_82] : memref<2x1x96xf32, #tpu.memory_space<vmem>>, vector<1x1x96xf32>
    %141 = vector.shape_cast %140 : vector<1x1x96xf32> to vector<1x96xf32>
    %142 = vector.broadcast %141 : vector<1x96xf32> to vector<16x96xf32>
    %143 = arith.addf %139, %142 : vector<16x96xf32>
    %144 = vector.extract_strided_slice %143 {offsets = [0, 0], sizes = [16, 32], strides = [1, 1]} : vector<16x96xf32> to vector<16x32xf32>
    %145 = vector.extract_strided_slice %143 {offsets = [0, 32], sizes = [16, 32], strides = [1, 1]} : vector<16x96xf32> to vector<16x32xf32>
    %146 = vector.extract_strided_slice %143 {offsets = [0, 64], sizes = [16, 32], strides = [1, 1]} : vector<16x96xf32> to vector<16x32xf32>
    %147 = tpu.concatenate %145, %145, %145, %145 in 0 : vector<16x32xf32>, vector<16x32xf32>, vector<16x32xf32>, vector<16x32xf32> -> vector<64x32xf32>
    %148 = arith.mulf %147, %32 : vector<64x32xf32>
    %149 = tpu.concatenate %146, %146, %146, %146 in 0 : vector<16x32xf32>, vector<16x32xf32>, vector<16x32xf32>, vector<16x32xf32> -> vector<64x32xf32>
    %150 = arith.mulf %149, %32 : vector<64x32xf32>
    "tpu.trace_start"() <{level = 10 : i32, message = "rd,cd->rc"}> : () -> ()
    %cst_83 = arith.constant dense<0.000000e+00> : vector<16x64xf32>
    %151 = tpu.matmul %144, %148, %cst_83 {dimension_numbers = #tpu.dot_dimension_numbers<[1], [1], [0], [0], [0, 0, 1, 0], [], []>} : vector<16x32xf32>, vector<64x32xf32>, vector<16x64xf32> -> vector<16x64xf32>
    "tpu.trace_stop"() : () -> ()
    %152 = arith.addf %151, %33 : vector<16x64xf32>
    %cst_84 = arith.constant dense<0xFF800000> : vector<16xf32>
    %153 = vector.multi_reduction <maximumf>, %152, %cst_84 [1] : vector<16x64xf32> to vector<16xf32>
    %154 = vector.shape_cast %153 : vector<16xf32> to vector<16x1xf32>
    %155 = vector.broadcast %154 : vector<16x1xf32> to vector<16x64xf32>
    %156 = arith.subf %152, %155 : vector<16x64xf32>
    %157 = math.exp %156 : vector<16x64xf32>
    %cst_85 = arith.constant dense<0.000000e+00> : vector<16x64xf32>
    %158 = tpu.matmul %157, %34, %cst_85 {dimension_numbers = #tpu.dot_dimension_numbers<[1], [0], [0], [1], [0, 0, 1, 1], [], []>} : vector<16x64xf32>, vector<64x64xf32>, vector<16x64xf32> -> vector<16x64xf32>
    %159 = tpu.reciprocal %158 {approx = true} : vector<16x64xf32> -> vector<16x64xf32>
    %160 = arith.mulf %157, %159 : vector<16x64xf32>
    %cst_86 = arith.constant dense<0.000000e+00> : vector<16x32xf32>
    %161 = tpu.matmul %160, %150, %cst_86 {dimension_numbers = #tpu.dot_dimension_numbers<[1], [0], [0], [1], [0, 0, 1, 1], [], []>} : vector<16x64xf32>, vector<64x32xf32>, vector<16x32xf32> -> vector<16x32xf32>
    %c1_87 = arith.constant 1 : index
    %c0_88 = arith.constant 0 : index
    %c0_89 = arith.constant 0 : index
    %162 = vector.load %arg8[%c1_87, %c0_88, %c0_89] : memref<2x32x32xf32, #tpu.memory_space<vmem>>, vector<1x32x32xf32>
    %163 = vector.shape_cast %162 : vector<1x32x32xf32> to vector<32x32xf32>
    %cst_90 = arith.constant dense<0.000000e+00> : vector<16x32xf32>
    %164 = tpu.matmul %161, %163, %cst_90 {dimension_numbers = #tpu.dot_dimension_numbers<[1], [0], [0], [1], [0, 0, 1, 1], [], []>} : vector<16x32xf32>, vector<32x32xf32>, vector<16x32xf32> -> vector<16x32xf32>
    %c1_91 = arith.constant 1 : index
    %c0_92 = arith.constant 0 : index
    %c0_93 = arith.constant 0 : index
    %165 = vector.load %arg9[%c1_91, %c0_92, %c0_93] : memref<2x1x32xf32, #tpu.memory_space<vmem>>, vector<1x1x32xf32>
    %166 = vector.shape_cast %165 : vector<1x1x32xf32> to vector<1x32xf32>
    %167 = vector.broadcast %166 : vector<1x32xf32> to vector<16x32xf32>
    %168 = arith.addf %164, %167 : vector<16x32xf32>
    %169 = arith.addf %136, %168 : vector<16x32xf32>
    %c1_94 = arith.constant 1 : index
    %c0_95 = arith.constant 0 : index
    %c0_96 = arith.constant 0 : index
    %170 = vector.load %arg10[%c1_94, %c0_95, %c0_96] : memref<2x1x32xf32, #tpu.memory_space<vmem>>, vector<1x1x32xf32>
    %171 = vector.shape_cast %170 : vector<1x1x32xf32> to vector<1x32xf32>
    %c1_97 = arith.constant 1 : index
    %c0_98 = arith.constant 0 : index
    %c0_99 = arith.constant 0 : index
    %172 = vector.load %arg11[%c1_97, %c0_98, %c0_99] : memref<2x1x32xf32, #tpu.memory_space<vmem>>, vector<1x1x32xf32>
    %173 = vector.shape_cast %172 : vector<1x1x32xf32> to vector<1x32xf32>
    %cst_100 = arith.constant dense<0.000000e+00> : vector<16xf32>
    %174 = vector.multi_reduction <add>, %169, %cst_100 [1] : vector<16x32xf32> to vector<16xf32>
    %175 = vector.shape_cast %174 : vector<16xf32> to vector<16x1xf32>
    %cst_101 = arith.constant 3.200000e+01 : f32
    %176 = vector.broadcast %cst_101 : f32 to vector<16x1xf32>
    %177 = arith.divf %175, %176 : vector<16x1xf32>
    %178 = vector.broadcast %177 : vector<16x1xf32> to vector<16x32xf32>
    %179 = arith.subf %169, %178 : vector<16x32xf32>
    %180 = arith.mulf %179, %179 : vector<16x32xf32>
    %cst_102 = arith.constant dense<0.000000e+00> : vector<16xf32>
    %181 = vector.multi_reduction <add>, %180, %cst_102 [1] : vector<16x32xf32> to vector<16xf32>
    %182 = vector.shape_cast %181 : vector<16xf32> to vector<16x1xf32>
    %cst_103 = arith.constant 3.200000e+01 : f32
    %183 = vector.broadcast %cst_103 : f32 to vector<16x1xf32>
    %184 = arith.divf %182, %183 : vector<16x1xf32>
    %185 = vector.broadcast %177 : vector<16x1xf32> to vector<16x32xf32>
    %186 = arith.subf %169, %185 : vector<16x32xf32>
    %cst_104 = arith.constant 9.99999974E-6 : f32
    %187 = vector.broadcast %cst_104 : f32 to vector<16x1xf32>
    %188 = arith.addf %184, %187 : vector<16x1xf32>
    %189 = math.rsqrt %188 : vector<16x1xf32>
    %190 = vector.broadcast %189 : vector<16x1xf32> to vector<16x32xf32>
    %191 = arith.mulf %186, %190 : vector<16x32xf32>
    %192 = vector.broadcast %171 : vector<1x32xf32> to vector<16x32xf32>
    %193 = arith.mulf %191, %192 : vector<16x32xf32>
    %194 = vector.broadcast %173 : vector<1x32xf32> to vector<16x32xf32>
    %195 = arith.addf %193, %194 : vector<16x32xf32>
    %c1_105 = arith.constant 1 : index
    %c0_106 = arith.constant 0 : index
    %c0_107 = arith.constant 0 : index
    %196 = vector.load %arg12[%c1_105, %c0_106, %c0_107] : memref<2x32x64xf32, #tpu.memory_space<vmem>>, vector<1x32x64xf32>
    %197 = vector.shape_cast %196 : vector<1x32x64xf32> to vector<32x64xf32>
    %cst_108 = arith.constant dense<0.000000e+00> : vector<16x64xf32>
    %198 = tpu.matmul %195, %197, %cst_108 {dimension_numbers = #tpu.dot_dimension_numbers<[1], [0], [0], [1], [0, 0, 1, 1], [], []>} : vector<16x32xf32>, vector<32x64xf32>, vector<16x64xf32> -> vector<16x64xf32>
    %c1_109 = arith.constant 1 : index
    %c0_110 = arith.constant 0 : index
    %c0_111 = arith.constant 0 : index
    %199 = vector.load %arg13[%c1_109, %c0_110, %c0_111] : memref<2x1x64xf32, #tpu.memory_space<vmem>>, vector<1x1x64xf32>
    %200 = vector.shape_cast %199 : vector<1x1x64xf32> to vector<1x64xf32>
    %201 = vector.broadcast %200 : vector<1x64xf32> to vector<16x64xf32>
    %202 = arith.addf %198, %201 : vector<16x64xf32>
    %cst_112 = arith.constant 0.000000e+00 : f32
    %203 = vector.broadcast %cst_112 : f32 to vector<16x64xf32>
    %204 = arith.maximumf %202, %203 : vector<16x64xf32>
    %c1_113 = arith.constant 1 : index
    %c0_114 = arith.constant 0 : index
    %c0_115 = arith.constant 0 : index
    %205 = vector.load %arg14[%c1_113, %c0_114, %c0_115] : memref<2x64x32xf32, #tpu.memory_space<vmem>>, vector<1x64x32xf32>
    %206 = vector.shape_cast %205 : vector<1x64x32xf32> to vector<64x32xf32>
    %cst_116 = arith.constant dense<0.000000e+00> : vector<16x32xf32>
    %207 = tpu.matmul %204, %206, %cst_116 {dimension_numbers = #tpu.dot_dimension_numbers<[1], [0], [0], [1], [0, 0, 1, 1], [], []>} : vector<16x64xf32>, vector<64x32xf32>, vector<16x32xf32> -> vector<16x32xf32>
    %c1_117 = arith.constant 1 : index
    %c0_118 = arith.constant 0 : index
    %c0_119 = arith.constant 0 : index
    %208 = vector.load %arg15[%c1_117, %c0_118, %c0_119] : memref<2x1x32xf32, #tpu.memory_space<vmem>>, vector<1x1x32xf32>
    %209 = vector.shape_cast %208 : vector<1x1x32xf32> to vector<1x32xf32>
    %210 = vector.broadcast %209 : vector<1x32xf32> to vector<16x32xf32>
    %211 = arith.addf %207, %210 : vector<16x32xf32>
    %212 = arith.addf %195, %211 : vector<16x32xf32>
    %c1_120 = arith.constant 1 : index
    %c0_121 = arith.constant 0 : index
    %c0_122 = arith.constant 0 : index
    %213 = vector.load %arg16[%c1_120, %c0_121, %c0_122] : memref<2x1x32xf32, #tpu.memory_space<vmem>>, vector<1x1x32xf32>
    %214 = vector.shape_cast %213 : vector<1x1x32xf32> to vector<1x32xf32>
    %c1_123 = arith.constant 1 : index
    %c0_124 = arith.constant 0 : index
    %c0_125 = arith.constant 0 : index
    %215 = vector.load %arg17[%c1_123, %c0_124, %c0_125] : memref<2x1x32xf32, #tpu.memory_space<vmem>>, vector<1x1x32xf32>
    %216 = vector.shape_cast %215 : vector<1x1x32xf32> to vector<1x32xf32>
    %cst_126 = arith.constant dense<0.000000e+00> : vector<16xf32>
    %217 = vector.multi_reduction <add>, %212, %cst_126 [1] : vector<16x32xf32> to vector<16xf32>
    %218 = vector.shape_cast %217 : vector<16xf32> to vector<16x1xf32>
    %cst_127 = arith.constant 3.200000e+01 : f32
    %219 = vector.broadcast %cst_127 : f32 to vector<16x1xf32>
    %220 = arith.divf %218, %219 : vector<16x1xf32>
    %221 = vector.broadcast %220 : vector<16x1xf32> to vector<16x32xf32>
    %222 = arith.subf %212, %221 : vector<16x32xf32>
    %223 = arith.mulf %222, %222 : vector<16x32xf32>
    %cst_128 = arith.constant dense<0.000000e+00> : vector<16xf32>
    %224 = vector.multi_reduction <add>, %223, %cst_128 [1] : vector<16x32xf32> to vector<16xf32>
    %225 = vector.shape_cast %224 : vector<16xf32> to vector<16x1xf32>
    %cst_129 = arith.constant 3.200000e+01 : f32
    %226 = vector.broadcast %cst_129 : f32 to vector<16x1xf32>
    %227 = arith.divf %225, %226 : vector<16x1xf32>
    %228 = vector.broadcast %220 : vector<16x1xf32> to vector<16x32xf32>
    %229 = arith.subf %212, %228 : vector<16x32xf32>
    %cst_130 = arith.constant 9.99999974E-6 : f32
    %230 = vector.broadcast %cst_130 : f32 to vector<16x1xf32>
    %231 = arith.addf %227, %230 : vector<16x1xf32>
    %232 = math.rsqrt %231 : vector<16x1xf32>
    %233 = vector.broadcast %232 : vector<16x1xf32> to vector<16x32xf32>
    %234 = arith.mulf %229, %233 : vector<16x32xf32>
    %235 = vector.broadcast %214 : vector<1x32xf32> to vector<16x32xf32>
    %236 = arith.mulf %234, %235 : vector<16x32xf32>
    %237 = vector.broadcast %216 : vector<1x32xf32> to vector<16x32xf32>
    %238 = arith.addf %236, %237 : vector<16x32xf32>
    %c0_131 = arith.constant 0 : index
    %c0_132 = arith.constant 0 : index
    %239 = vector.load %arg23[%c0_131, %c0_132] : memref<2x16xf32, #tpu.memory_space<vmem>>, vector<2x16xf32>
    %cst_133 = arith.constant dense<0.000000e+00> : vector<2x32xf32>
    %240 = tpu.matmul %239, %238, %cst_133 {dimension_numbers = #tpu.dot_dimension_numbers<[1], [0], [0], [1], [0, 0, 1, 1], [], []>} : vector<2x16xf32>, vector<16x32xf32>, vector<2x32xf32> -> vector<2x32xf32>
    %c0_134 = arith.constant 0 : index
    %c0_135 = arith.constant 0 : index
    %241 = vector.load %arg18[%c0_134, %c0_135] : memref<32x1xf32, #tpu.memory_space<vmem>>, vector<32x1xf32>
    %cst_136 = arith.constant dense<0.000000e+00> : vector<2x1xf32>
    %242 = tpu.matmul %240, %241, %cst_136 {dimension_numbers = #tpu.dot_dimension_numbers<[1], [0], [0], [1], [0, 0, 1, 1], [], []>} : vector<2x32xf32>, vector<32x1xf32>, vector<2x1xf32> -> vector<2x1xf32>
    %c0_137 = arith.constant 0 : index
    %c0_138 = arith.constant 0 : index
    %243 = vector.load %arg19[%c0_137, %c0_138] : memref<1x1xf32, #tpu.memory_space<vmem>>, vector<1x1xf32>
    %244 = vector.broadcast %243 : vector<1x1xf32> to vector<2x1xf32>
    %245 = arith.addf %242, %244 : vector<2x1xf32>
    %246 = arith.negf %245 : vector<2x1xf32>
    %247 = math.exp %246 : vector<2x1xf32>
    %cst_139 = arith.constant 1.000000e+00 : f32
    %248 = vector.broadcast %cst_139 : f32 to vector<2x1xf32>
    %249 = arith.addf %248, %247 : vector<2x1xf32>
    %250 = arith.divf %248, %249 : vector<2x1xf32>
    %c0_140 = arith.constant 0 : index
    %c0_141 = arith.constant 0 : index
    %251 = vector.load %arg24[%c0_140, %c0_141] : memref<2x1xf32, #tpu.memory_space<vmem>>, vector<2x1xf32>
    tpu.vector_store %arg24[%c0_140, %c0_141], %250 {strides = array<i32>} : memref<2x1xf32, #tpu.memory_space<vmem>>, vector<2x1xf32>,
    return
  }
}

</mosaic_0001>

<llo_original>
// kernel: tpu_custom_call.1
$region0: #{tpu_custom_call.1}
  #allocation0 [shape = 'u32[]', space=smem, size = 0x4, offset = 0x4, fixed_abs, tag = 'smem constant byte address 0x4 - core index']
  #allocation1 [shape = 'u32[144,128]{1,0:T(1,128)}', space=vmem, size = 0x12000, scoped, tag = 'internal scratch']
  #allocation2 [shape = 'f32[1,1]{1,0:T(1,128)S(1)}', space=vmem, size = 0x200, scoped, tag = 'scoped memory for tpu_custom_call.1']
  %s0 = inlined_call_operand.vmem [shape: f32[16,4], index: 0, kind: input, shape index: {}]
  %s1 = inlined_call_operand.hbm [shape: f32[16,32], index: 1, kind: input, shape index: {}]
  %s2 = inlined_call_operand.hbm [shape: f32[4,32], index: 2, kind: input, shape index: {}]
  %s3 = inlined_call_operand.hbm [shape: f32[1,32], index: 3, kind: input, shape index: {}]
  %s4 = inlined_call_operand.hbm [shape: f32[1,32], index: 4, kind: input, shape index: {}]
  %s5 = inlined_call_operand.hbm [shape: f32[1,32], index: 5, kind: input, shape index: {}]
  %s6 = inlined_call_operand.vmem [shape: f32[2,32,96], index: 6, kind: input, shape index: {}]
  %s7 = inlined_call_operand.vmem [shape: f32[2,1,96], index: 7, kind: input, shape index: {}]
  %s8 = inlined_call_operand.vmem [shape: f32[2,32,32], index: 8, kind: input, shape index: {}]
  %s9 = inlined_call_operand.vmem [shape: f32[2,1,32], index: 9, kind: input, shape index: {}]
  %s10 = inlined_call_operand.hbm [shape: f32[2,1,32], index: 10, kind: input, shape index: {}]
  %s11 = inlined_call_operand.hbm [shape: f32[2,1,32], index: 11, kind: input, shape index: {}]
  %s12 = inlined_call_operand.vmem [shape: f32[2,32,64], index: 12, kind: input, shape index: {}]
  %s13 = inlined_call_operand.hbm [shape: f32[2,1,64], index: 13, kind: input, shape index: {}]
  %s14 = inlined_call_operand.vmem [shape: f32[2,64,32], index: 14, kind: input, shape index: {}]
  %s15 = inlined_call_operand.hbm [shape: f32[2,1,32], index: 15, kind: input, shape index: {}]
  %s16 = inlined_call_operand.hbm [shape: f32[2,1,32], index: 16, kind: input, shape index: {}]
  %s17 = inlined_call_operand.hbm [shape: f32[2,1,32], index: 17, kind: input, shape index: {}]
  %s18 = inlined_call_operand.vmem [shape: f32[32,1], index: 18, kind: input, shape index: {}]
  %s19 = inlined_call_operand.<no memory space> [shape: f32[1,1], index: 19, kind: input, shape index: {}]
  %s20 = inlined_call_operand.vmem [shape: f32[64,32], index: 20, kind: input, shape index: {}]
  %s21 = inlined_call_operand.vmem [shape: f32[16,64], index: 21, kind: input, shape index: {}]
  %s22 = inlined_call_operand.vmem [shape: f32[64,64], index: 22, kind: input, shape index: {}]
  %s23 = inlined_call_operand.vmem [shape: f32[2,16], index: 23, kind: input, shape index: {}]
  %s24 = inlined_call_operand.vmem [shape: f32[2,1], index: 24, kind: output, shape index: {}]
  %s25 = sld [smem:[#allocation0]]
  $region150: #{tpu_custom_call.1} parent=0
    _
  %s27 = ssub.s32 1, %s25
  %s28 = scalar_select 0, %s27, %s25
  %v29 = vstv %s19
  %30 = vst [vmem:[#allocation2] sm:$0x1] %v29
  $region1: #{tpu_custom_call.1} parent=0
    #allocation3 [shape = 'u8[8192]{0}', space=vmem, size = 0x2000, scoped, tag = 'input window, operand 1, single buffered']
    #allocation4 [shape = 's32[1]{0}', space=sflag, size = 0x4, scoped, tag = 'scoped memory for tpu_custom_call.1']
    #allocation5 [shape = 'u8[2048]{0}', space=vmem, size = 0x800, scoped, tag = 'input window, operand 2, single buffered']
    #allocation6 [shape = 's32[1]{0}', space=sflag, size = 0x4, scoped, tag = 'scoped memory for tpu_custom_call.1']
    #allocation7 [shape = 'u8[512]{0}', space=vmem, size = 0x400, scoped, tag = 'input window, operand 3, single buffered']
    #allocation8 [shape = 'u8[512]{0}', space=vmem, size = 0x400, scoped, tag = 'input window, operand 4, single buffered']
    #allocation9 [shape = 's32[1]{0}', space=sflag, size = 0x4, scoped, tag = 'scoped memory for tpu_custom_call.1']
    #allocation10 [shape = 'u8[512]{0}', space=vmem, size = 0x400, scoped, tag = 'input window, operand 5, single buffered']
    #allocation11 [shape = 'u8[1024]{0}', space=vmem, size = 0x400, scoped, tag = 'input window, operand 10, single buffered']
    #allocation12 [shape = 's32[1]{0}', space=sflag, size = 0x4, scoped, tag = 'scoped memory for tpu_custom_call.1']
    #allocation13 [shape = 'u8[1024]{0}', space=vmem, size = 0x400, scoped, tag = 'input window, operand 11, single buffered']
    #allocation14 [shape = 'u8[1024]{0}', space=vmem, size = 0x400, scoped, tag = 'input window, operand 13, single buffered']
    #allocation15 [shape = 's32[1]{0}', space=sflag, size = 0x4, scoped, tag = 'scoped memory for tpu_custom_call.1']
    #allocation16 [shape = 'u8[1024]{0}', space=vmem, size = 0x400, scoped, tag = 'input window, operand 15, single buffered']
    #allocation17 [shape = 'u8[1024]{0}', space=vmem, size = 0x400, scoped, tag = 'input window, operand 16, single buffered']
    #allocation18 [shape = 's32[1]{0}', space=sflag, size = 0x4, scoped, tag = 'scoped memory for tpu_custom_call.1']
    #allocation19 [shape = 'u8[1024]{0}', space=vmem, size = 0x400, scoped, tag = 'input window, operand 17, single buffered']
    %31 = vsyncpa [#allocation4], 0
    %32 = vsyncpa [#allocation6], 0
    %33 = vsyncpa [#allocation9], 0
    %34 = vsyncpa [#allocation12], 0
    %35 = vsyncpa [#allocation15], 0
    %36 = vsyncpa [#allocation18], 0
    // Predicated region
    $region2: #{tpu_custom_call.1} parent=1 // pred_check
      _
    $region3: #{tpu_custom_call.1} parent=1 // pred_check_branch
      %38 = sbr.rel (0) target = $region5
    $region4: #{tpu_custom_call.1} parent=1 // pred_region
      _
    $region5: #{tpu_custom_call.1} parent=1 // pred_fallthru
      _
    // Predicated region
    $region6: #{tpu_custom_call.1} parent=1 // pred_check
      _
    $region7: #{tpu_custom_call.1} parent=1 // pred_check_branch
      %40 = sbr.rel (0) target = $region9
    $region8: #{tpu_custom_call.1} parent=1 // pred_region
      %s42 = ssub.s32 256, 256
      %43 = vsyncadd [#allocation4], %s42
      %s44 = sshll.u32 [#allocation3], 4
      %s45 = int_to_ptr.vmem [resolvable:$true] %s44
      %50 = dma.hbm_to_vmem [thread:$0]  %s1, 256, %s45, [#allocation4], 128, 128, 8
    $region9: #{tpu_custom_call.1} parent=1 // pred_fallthru
      _
    // Predicated region
    $region10: #{tpu_custom_call.1} parent=1 // pred_check
      _
    $region11: #{tpu_custom_call.1} parent=1 // pred_check_branch
      %52 = sbr.rel (0) target = $region13
    $region12: #{tpu_custom_call.1} parent=1 // pred_region
      %s54 = ssub.s32 64, 64
      %55 = vsyncadd [#allocation6], %s54
      %s57 = sshll.u32 [#allocation5], 4
      %s58 = int_to_ptr.vmem [resolvable:$true] %s57
      %60 = dma.hbm_to_vmem [thread:$0]  %s2, 64, %s58, [#allocation6]
    $region13: #{tpu_custom_call.1} parent=1 // pred_fallthru
      _
    // Predicated region
    $region14: #{tpu_custom_call.1} parent=1 // pred_check
      _
    $region15: #{tpu_custom_call.1} parent=1 // pred_check_branch
      %62 = sbr.rel (0) target = $region17
    $region16: #{tpu_custom_call.1} parent=1 // pred_region
      %s64 = ssub.s32 16, 16
      %65 = vsyncadd [#allocation6], %s64
      %s67 = sshll.u32 [#allocation7], 4
      %s68 = int_to_ptr.vmem [resolvable:$true] %s67
      %70 = dma.hbm_to_vmem [thread:$0]  %s3, 16, %s68, [#allocation6]
    $region17: #{tpu_custom_call.1} parent=1 // pred_fallthru
      _
    // Predicated region
    $region18: #{tpu_custom_call.1} parent=1 // pred_check
      _
    $region19: #{tpu_custom_call.1} parent=1 // pred_check_branch
      %72 = sbr.rel (0) target = $region21
    $region20: #{tpu_custom_call.1} parent=1 // pred_region
      %s74 = ssub.s32 16, 16
      %75 = vsyncadd [#allocation9], %s74
      %s77 = sshll.u32 [#allocation8], 4
      %s78 = int_to_ptr.vmem [resolvable:$true] %s77
      %80 = dma.hbm_to_vmem [thread:$0]  %s4, 16, %s78, [#allocation9]
    $region21: #{tpu_custom_call.1} parent=1 // pred_fallthru
      _
    // Predicated region
    $region22: #{tpu_custom_call.1} parent=1 // pred_check
      _
    $region23: #{tpu_custom_call.1} parent=1 // pred_check_branch
      %82 = sbr.rel (0) target = $region25
    $region24: #{tpu_custom_call.1} parent=1 // pred_region
      %s84 = ssub.s32 16, 16
      %85 = vsyncadd [#allocation9], %s84
      %s87 = sshll.u32 [#allocation10], 4
      %s88 = int_to_ptr.vmem [resolvable:$true] %s87
      %90 = dma.hbm_to_vmem [thread:$0]  %s5, 16, %s88, [#allocation9]
    $region25: #{tpu_custom_call.1} parent=1 // pred_fallthru
      _
    // Predicated region
    $region26: #{tpu_custom_call.1} parent=1 // pred_check
      _
    $region27: #{tpu_custom_call.1} parent=1 // pred_check_branch
      %92 = sbr.rel (0) target = $region29
    $region28: #{tpu_custom_call.1} parent=1 // pred_region
      _
    $region29: #{tpu_custom_call.1} parent=1 // pred_fallthru
      _
    // Predicated region
    $region30: #{tpu_custom_call.1} parent=1 // pred_check
      _
    $region31: #{tpu_custom_call.1} parent=1 // pred_check_branch
      %94 = sbr.rel (0) target = $region33
    $region32: #{tpu_custom_call.1} parent=1 // pred_region
      _
    $region33: #{tpu_custom_call.1} parent=1 // pred_fallthru
      _
    // Predicated region
    $region34: #{tpu_custom_call.1} parent=1 // pred_check
      _
    $region35: #{tpu_custom_call.1} parent=1 // pred_check_branch
      %96 = sbr.rel (0) target = $region37
    $region36: #{tpu_custom_call.1} parent=1 // pred_region
      _
    $region37: #{tpu_custom_call.1} parent=1 // pred_fallthru
      _
    // Predicated region
    $region38: #{tpu_custom_call.1} parent=1 // pred_check
      _
    $region39: #{tpu_custom_call.1} parent=1 // pred_check_branch
      %98 = sbr.rel (0) target = $region41
    $region40: #{tpu_custom_call.1} parent=1 // pred_region
      _
    $region41: #{tpu_custom_call.1} parent=1 // pred_fallthru
      _
    // Predicated region
    $region42: #{tpu_custom_call.1} parent=1 // pred_check
      _
    $region43: #{tpu_custom_call.1} parent=1 // pred_check_branch
      %100 = sbr.rel (0) target = $region45
    $region44: #{tpu_custom_call.1} parent=1 // pred_region
      %s102 = ssub.s32 32, 32
      %103 = vsyncadd [#allocation12], %s102
      %s104 = sshll.u32 [#allocation11], 4
      %s105 = int_to_ptr.vmem [resolvable:$true] %s104
      %110 = dma.hbm_to_vmem [thread:$0]  %s10, 32, %s105, [#allocation12], 16, 16, 1
    $region45: #{tpu_custom_call.1} parent=1 // pred_fallthru
      _
    // Predicated region
    $region46: #{tpu_custom_call.1} parent=1 // pred_check
      _
    $region47: #{tpu_custom_call.1} parent=1 // pred_check_branch
      %112 = sbr.rel (0) target = $region49
    $region48: #{tpu_custom_call.1} parent=1 // pred_region
      %s114 = ssub.s32 32, 32
      %115 = vsyncadd [#allocation12], %s114
      %s116 = sshll.u32 [#allocation13], 4
      %s117 = int_to_ptr.vmem [resolvable:$true] %s116
      %122 = dma.hbm_to_vmem [thread:$0]  %s11, 32, %s117, [#allocation12], 16, 16, 1
    $region49: #{tpu_custom_call.1} parent=1 // pred_fallthru
      _
    // Predicated region
    $region50: #{tpu_custom_call.1} parent=1 // pred_check
      _
    $region51: #{tpu_custom_call.1} parent=1 // pred_check_branch
      %124 = sbr.rel (0) target = $region53
    $region52: #{tpu_custom_call.1} parent=1 // pred_region
      _
    $region53: #{tpu_custom_call.1} parent=1 // pred_fallthru
      _
    // Predicated region
    $region54: #{tpu_custom_call.1} parent=1 // pred_check
      _
    $region55: #{tpu_custom_call.1} parent=1 // pred_check_branch
      %126 = sbr.rel (0) target = $region57
    $region56: #{tpu_custom_call.1} parent=1 // pred_region
      %s128 = ssub.s32 32, 32
      %129 = vsyncadd [#allocation15], %s128
      %s130 = sshll.u32 [#allocation14], 4
      %s131 = int_to_ptr.vmem [resolvable:$true] %s130
      %136 = dma.hbm_to_vmem [thread:$0]  %s13, 32, %s131, [#allocation15], 16, 16, 1
    $region57: #{tpu_custom_call.1} parent=1 // pred_fallthru
      _
    // Predicated region
    $region58: #{tpu_custom_call.1} parent=1 // pred_check
      _
    $region59: #{tpu_custom_call.1} parent=1 // pred_check_branch
      %138 = sbr.rel (0) target = $region61
    $region60: #{tpu_custom_call.1} parent=1 // pred_region
      _
    $region61: #{tpu_custom_call.1} parent=1 // pred_fallthru
      _
    // Predicated region
    $region62: #{tpu_custom_call.1} parent=1 // pred_check
      _
    $region63: #{tpu_custom_call.1} parent=1 // pred_check_branch
      %140 = sbr.rel (0) target = $region65
    $region64: #{tpu_custom_call.1} parent=1 // pred_region
      %s142 = ssub.s32 32, 32
      %143 = vsyncadd [#allocation15], %s142
      %s144 = sshll.u32 [#allocation16], 4
      %s145 = int_to_ptr.vmem [resolvable:$true] %s144
      %150 = dma.hbm_to_vmem [thread:$0]  %s15, 32, %s145, [#allocation15], 16, 16, 1
    $region65: #{tpu_custom_call.1} parent=1 // pred_fallthru
      _
    // Predicated region
    $region66: #{tpu_custom_call.1} parent=1 // pred_check
      _
    $region67: #{tpu_custom_call.1} parent=1 // pred_check_branch
      %152 = sbr.rel (0) target = $region69
    $region68: #{tpu_custom_call.1} parent=1 // pred_region
      %s154 = ssub.s32 32, 32
      %155 = vsyncadd [#allocation18], %s154
      %s156 = sshll.u32 [#allocation17], 4
      %s157 = int_to_ptr.vmem [resolvable:$true] %s156
      %162 = dma.hbm_to_vmem [thread:$0]  %s16, 32, %s157, [#allocation18], 16, 16, 1
    $region69: #{tpu_custom_call.1} parent=1 // pred_fallthru
      _
    // Predicated region
    $region70: #{tpu_custom_call.1} parent=1 // pred_check
      _
    $region71: #{tpu_custom_call.1} parent=1 // pred_check_branch
      %164 = sbr.rel (0) target = $region73
    $region72: #{tpu_custom_call.1} parent=1 // pred_region
      %s166 = ssub.s32 32, 32
      %167 = vsyncadd [#allocation18], %s166
      %s168 = sshll.u32 [#allocation19], 4
      %s169 = int_to_ptr.vmem [resolvable:$true] %s168
      %174 = dma.hbm_to_vmem [thread:$0]  %s17, 32, %s169, [#allocation18], 16, 16, 1
    $region73: #{tpu_custom_call.1} parent=1 // pred_fallthru
      _
    // Predicated region
    $region74: #{tpu_custom_call.1} parent=1 // pred_check
      _
    $region75: #{tpu_custom_call.1} parent=1 // pred_check_branch
      %176 = sbr.rel (0) target = $region77
    $region76: #{tpu_custom_call.1} parent=1 // pred_region
      _
    $region77: #{tpu_custom_call.1} parent=1 // pred_fallthru
      _
    // Predicated region
    $region78: #{tpu_custom_call.1} parent=1 // pred_check
      _
    $region79: #{tpu_custom_call.1} parent=1 // pred_check_branch
      %178 = sbr.rel (0) target = $region81
    $region80: #{tpu_custom_call.1} parent=1 // pred_region
      _
    $region81: #{tpu_custom_call.1} parent=1 // pred_fallthru
      _
    // Predicated region
    $region82: #{tpu_custom_call.1} parent=1 // pred_check
      _
    $region83: #{tpu_custom_call.1} parent=1 // pred_check_branch
      %180 = sbr.rel (0) target = $region85
    $region84: #{tpu_custom_call.1} parent=1 // pred_region
      _
    $region85: #{tpu_custom_call.1} parent=1 // pred_fallthru
      _
    // Predicated region
    $region86: #{tpu_custom_call.1} parent=1 // pred_check
      _
    $region87: #{tpu_custom_call.1} parent=1 // pred_check_branch
      %182 = sbr.rel (0) target = $region89
    $region88: #{tpu_custom_call.1} parent=1 // pred_region
      _
    $region89: #{tpu_custom_call.1} parent=1 // pred_fallthru
      _
    // Predicated region
    $region90: #{tpu_custom_call.1} parent=1 // pred_check
      _
    $region91: #{tpu_custom_call.1} parent=1 // pred_check_branch
      %184 = sbr.rel (0) target = $region93
    $region92: #{tpu_custom_call.1} parent=1 // pred_region
      _
    $region93: #{tpu_custom_call.1} parent=1 // pred_fallthru
      _
    // Predicated region
    $region94: #{tpu_custom_call.1} parent=1 // pred_check
      _
    $region95: #{tpu_custom_call.1} parent=1 // pred_check_branch
      %186 = sbr.rel (0) target = $region97
    $region96: #{tpu_custom_call.1} parent=1 // pred_region
      _
    $region97: #{tpu_custom_call.1} parent=1 // pred_fallthru
      _
    // Predicated region
    $region98: #{tpu_custom_call.1} parent=1 // pred_check
      _
    $region99: #{tpu_custom_call.1} parent=1 // pred_check_branch
      %188 = sbr.rel (0) target = $region101
    $region100: #{tpu_custom_call.1} parent=1 // pred_region
      %189 = dma.done [#allocation4], 256
    $region101: #{tpu_custom_call.1} parent=1 // pred_fallthru
      _
    // Predicated region
    $region102: #{tpu_custom_call.1} parent=1 // pred_check
      _
    $region103: #{tpu_custom_call.1} parent=1 // pred_check_branch
      %191 = sbr.rel (0) target = $region105
    $region104: #{tpu_custom_call.1} parent=1 // pred_region
      %192 = dma.done [#allocation6], 64
    $region105: #{tpu_custom_call.1} parent=1 // pred_fallthru
      _
    // Predicated region
    $region106: #{tpu_custom_call.1} parent=1 // pred_check
      _
    $region107: #{tpu_custom_call.1} parent=1 // pred_check_branch
      %194 = sbr.rel (0) target = $region109
    $region108: #{tpu_custom_call.1} parent=1 // pred_region
      %195 = dma.done [#allocation6], 16
    $region109: #{tpu_custom_call.1} parent=1 // pred_fallthru
      _
    // Predicated region
    $region110: #{tpu_custom_call.1} parent=1 // pred_check
      _
    $region111: #{tpu_custom_call.1} parent=1 // pred_check_branch
      %197 = sbr.rel (0) target = $region113
    $region112: #{tpu_custom_call.1} parent=1 // pred_region
      %198 = dma.done [#allocation9], 16
    $region113: #{tpu_custom_call.1} parent=1 // pred_fallthru
      _
    // Predicated region
    $region114: #{tpu_custom_call.1} parent=1 // pred_check
      _
    $region115: #{tpu_custom_call.1} parent=1 // pred_check_branch
      %200 = sbr.rel (0) target = $region117
    $region116: #{tpu_custom_call.1} parent=1 // pred_region
      %201 = dma.done [#allocation9], 16
    $region117: #{tpu_custom_call.1} parent=1 // pred_fallthru
      _
    // Predicated region
    $region118: #{tpu_custom_call.1} parent=1 // pred_check
      _
    $region119: #{tpu_custom_call.1} parent=1 // pred_check_branch
      %203 = sbr.rel (0) target = $region121
    $region120: #{tpu_custom_call.1} parent=1 // pred_region
      %204 = dma.done [#allocation12], 32
    $region121: #{tpu_custom_call.1} parent=1 // pred_fallthru
      _
    // Predicated region
    $region122: #{tpu_custom_call.1} parent=1 // pred_check
      _
    $region123: #{tpu_custom_call.1} parent=1 // pred_check_branch
      %206 = sbr.rel (0) target = $region125
    $region124: #{tpu_custom_call.1} parent=1 // pred_region
      %207 = dma.done [#allocation12], 32
    $region125: #{tpu_custom_call.1} parent=1 // pred_fallthru
      _
    // Predicated region
    $region126: #{tpu_custom_call.1} parent=1 // pred_check
      _
    $region127: #{tpu_custom_call.1} parent=1 // pred_check_branch
      %209 = sbr.rel (0) target = $region129
    $region128: #{tpu_custom_call.1} parent=1 // pred_region
      %210 = dma.done [#allocation15], 32
    $region129: #{tpu_custom_call.1} parent=1 // pred_fallthru
      _
    // Predicated region
    $region130: #{tpu_custom_call.1} parent=1 // pred_check
      _
    $region131: #{tpu_custom_call.1} parent=1 // pred_check_branch
      %212 = sbr.rel (0) target = $region133
    $region132: #{tpu_custom_call.1} parent=1 // pred_region
      %213 = dma.done [#allocation15], 32
    $region133: #{tpu_custom_call.1} parent=1 // pred_fallthru
      _
    // Predicated region
    $region134: #{tpu_custom_call.1} parent=1 // pred_check
      _
    $region135: #{tpu_custom_call.1} parent=1 // pred_check_branch
      %215 = sbr.rel (0) target = $region137
    $region136: #{tpu_custom_call.1} parent=1 // pred_region
      %216 = dma.done [#allocation18], 32
    $region137: #{tpu_custom_call.1} parent=1 // pred_fallthru
      _
    // Predicated region
    $region138: #{tpu_custom_call.1} parent=1 // pred_check
      _
    $region139: #{tpu_custom_call.1} parent=1 // pred_check_branch
      %218 = sbr.rel (0) target = $region141
    $region140: #{tpu_custom_call.1} parent=1 // pred_region
      %219 = dma.done [#allocation18], 32
    $region141: #{tpu_custom_call.1} parent=1 // pred_fallthru
      _
    %v220 = vld [vmem:[%s0] sm:$0xff]
    %v221 = vld [vmem:[%s0 + $0x8] sm:$0xff]
    %v222 = vld [vmem:[#allocation5] sm:$0xf]
    %v223 = vld [vmem:[#allocation7] sm:$0x1]
    %v225 = vlaneseq
    %v226 = vshrl.u32 %v225, 7
    %v227 = vsub.s32 0, %v226
    %v228 = vrot.slane %v223, %v227
    %vm230 = vcmask 31744
    %v232 = vsel %vm230, %v220, 0
    %v235 = vsel %vm230, %v221, 0
    %vm237 = vcmask 1043456
    %v239 = vsel %vm237, %v222, 0
    %241 = vmatprep.subr.mxu0 0.0
    %242 = vmatpush1.msra.mxu0 0.0
    %243 = vmatprep.subr.mxu0 0.0
    %244 = vmatpush1.msra.mxu0 0.0
    %245 = vmatprep.subr.mxu0 0.0
    %246 = vmatpush1.msra.mxu0 0.0
    %247 = vmatprep.subr.mxu0 0.0
    %248 = vmatpush1.msra.mxu0 0.0
    %249 = vmatprep.subr.mxu0 0.0
    %250 = vmatpush1.msra.mxu0 0.0
    %251 = vmatprep.subr.mxu0 0.0
    %252 = vmatpush1.msra.mxu0 0.0
    %253 = vmatprep.subr.mxu0 0.0
    %254 = vmatpush1.msra.mxu0 0.0
    %255 = vmatprep.subr.mxu0 0.0
    %256 = vmatpush1.msra.mxu0 0.0
    %257 = vmatprep.subr.mxu0 0.0
    %258 = vmatpush1.msra.mxu0 0.0
    %259 = vmatprep.subr.mxu0 0.0
    %260 = vmatpush1.msra.mxu0 0.0
    %261 = vmatprep.subr.mxu0 0.0
    %262 = vmatpush1.msra.mxu0 0.0
    %263 = vmatprep.subr.mxu0 0.0
    %264 = vmatpush1.msra.mxu0 0.0
    %265 = vmatprep.subr.mxu0 0.0
    %266 = vmatpush1.msra.mxu0 0.0
    %267 = vmatprep.subr.mxu0 0.0
    %268 = vmatpush1.msra.mxu0 0.0
    %269 = vmatprep.subr.mxu0 0.0
    %270 = vmatpush1.msra.mxu0 0.0
    %271 = vmatprep.subr.mxu0 0.0
    %272 = vmatpush1.msra.mxu0 %v239
    %273 = vmatprep.subr.mxu0 0.0
    %274 = vmatpush2.msra.mxu0 0.0
    %275 = vmatprep.subr.mxu0 0.0
    %276 = vmatpush2.msra.mxu0 0.0
    %277 = vmatprep.subr.mxu0 0.0
    %278 = vmatpush2.msra.mxu0 0.0
    %279 = vmatprep.subr.mxu0 0.0
    %280 = vmatpush2.msra.mxu0 0.0
    %281 = vmatprep.subr.mxu0 0.0
    %282 = vmatpush2.msra.mxu0 0.0
    %283 = vmatprep.subr.mxu0 0.0
    %284 = vmatpush2.msra.mxu0 0.0
    %285 = vmatprep.subr.mxu0 0.0
    %286 = vmatpush2.msra.mxu0 0.0
    %287 = vmatprep.subr.mxu0 0.0
    %288 = vmatpush2.msra.mxu0 0.0
    %289 = vmatprep.subr.mxu0 0.0
    %290 = vmatpush2.msra.mxu0 0.0
    %291 = vmatprep.subr.mxu0 0.0
    %292 = vmatpush2.msra.mxu0 0.0
    %293 = vmatprep.subr.mxu0 0.0
    %294 = vmatpush2.msra.mxu0 0.0
    %295 = vmatprep.subr.mxu0 0.0
    %296 = vmatpush2.msra.mxu0 0.0
    %297 = vmatprep.subr.mxu0 0.0
    %298 = vmatpush2.msra.mxu0 0.0
    %299 = vmatprep.subr.mxu0 0.0
    %300 = vmatpush2.msra.mxu0 0.0
    %301 = vmatprep.subr.mxu0 0.0
    %302 = vmatpush2.msra.mxu0 0.0
    %303 = vmatprep.subr.mxu0 0.0
    %304 = vmatpush2.msra.mxu0 0.0
    %305 = vmatprep.mubr.f32.mxu0 0.0
    %306 = vmatmul.mubr.f32.gmra.mxu0 %v232
    %v307 = vpop.f32.mrf.mxu0
    %v308 = vadd.f32 %v228, %v307
    %v309 = vpop.f32.mrf.mxu0
    %310 = vmatprep.mubr.f32.mxu0 0.0
    %311 = vmatmul.mubr.f32.gmra.mxu0 %v235
    %v312 = vpop.f32.mrf.mxu0
    %v313 = vadd.f32 %v228, %v312
    %v314 = vpop.f32.mrf.mxu0
    %315 = vdwg.mxu0
    %v316 = vld [vmem:[#allocation3] sm:$0xff]
    %v317 = vld [vmem:[#allocation3 + $0x8] sm:$0xff]
    %v318 = vadd.f32 %v308, %v316
    %v319 = vadd.f32 %v313, %v317
    %v320 = vld [vmem:[#allocation8] sm:$0x1]
    %v321 = vld [vmem:[#allocation10] sm:$0x1]
    %vm322 = vcmask 261120
    %v323 = vsel %vm322, %v318, 0.0
    %324 = vadd.xlane.f32.xlu0 %v323
    %v325 = vpop.xlane.xlu0 %324
    %v326 = vsel %vm322, %v319, 0.0
    %327 = vadd.xlane.f32.xlu0 %v326
    %v328 = vpop.xlane.xlu0 %327
    %v329 = vrcp.pop 32.0
    %v330 = vmul.f32 %v325, %v329
    %v331 = vmul.f32 %v328, %v329
    %v332 = vsub.f32 %v318, %v330
    %v333 = vsub.f32 %v319, %v331
    %v334 = vmul.f32 %v332, %v332
    %v335 = vmul.f32 %v333, %v333
    %v336 = vsel %vm322, %v334, 0.0
    %337 = vadd.xlane.f32.xlu0 %v336
    %v338 = vpop.xlane.xlu0 %337
    %v339 = vsel %vm322, %v335, 0.0
    %340 = vadd.xlane.f32.xlu0 %v339
    %v341 = vpop.xlane.xlu0 %340
    %v342 = vmul.f32 %v338, %v329
    %v343 = vmul.f32 %v341, %v329
    %v344 = vadd.f32 %v342, 1e-05
    %v345 = vadd.f32 %v343, 1e-05
    %v346 = vrsqrt.pop %v344
    %v347 = vrsqrt.pop %v345
    %v348 = vmul.f32 %v332, %v346
    %v349 = vmul.f32 %v333, %v347
    %v351 = vlaneseq
    %v352 = vshrl.u32 %v351, 7
    %v353 = vsub.s32 0, %v352
    %v354 = vrot.slane %v320, %v353
    %v356 = vmul.f32 %v348, %v354
    %v357 = vmul.f32 %v349, %v354
    %v359 = vlaneseq
    %v360 = vshrl.u32 %v359, 7
    %v361 = vsub.s32 0, %v360
    %v362 = vrot.slane %v321, %v361
    %v364 = vadd.f32 %v356, %v362
    %v365 = vadd.f32 %v357, %v362
    %v366 = vld [vmem:[%s20] sm:$0xff]
    %v367 = vld [vmem:[%s20 + $0x8] sm:$0xff]
    %v368 = vld [vmem:[%s20 + $0x10] sm:$0xff]
    %v369 = vld [vmem:[%s20 + $0x18] sm:$0xff]
    %v370 = vld [vmem:[%s20 + $0x20] sm:$0xff]
    %v371 = vld [vmem:[%s20 + $0x28] sm:$0xff]
    %v372 = vld [vmem:[%s20 + $0x30] sm:$0xff]
    %v373 = vld [vmem:[%s20 + $0x38] sm:$0xff]
    %v374 = vld [vmem:[%s21] sm:$0xff]
    %v375 = vld [vmem:[%s21 + $0x8] sm:$0xff]
    %v376 = vld [vmem:[%s22] sm:$0xff]
    %v377 = vld [vmem:[%s22 + $0x8] sm:$0xff]
    %v378 = vld [vmem:[%s22 + $0x10] sm:$0xff]
    %v379 = vld [vmem:[%s22 + $0x18] sm:$0xff]
    %v380 = vld [vmem:[%s22 + $0x20] sm:$0xff]
    %v381 = vld [vmem:[%s22 + $0x28] sm:$0xff]
    %v382 = vld [vmem:[%s22 + $0x30] sm:$0xff]
    %v383 = vld [vmem:[%s22 + $0x38] sm:$0xff]
    %v384 = vld [vmem:[%s6] sm:$0xff]
    %v385 = vld [vmem:[%s6 + $0x8] sm:$0xff]
    %v386 = vld [vmem:[%s6 + $0x10] sm:$0xff]
    %v387 = vld [vmem:[%s6 + $0x18] sm:$0xff]
    %v388 = vld [vmem:[%s7] sm:$0x1]
    %v390 = vlaneseq
    %v391 = vshrl.u32 %v390, 7
    %v392 = vsub.s32 0, %v391
    %v393 = vrot.slane %v388, %v392
    %v396 = vsel %vm322, %v364, 0
    %v399 = vsel %vm322, %v365, 0
    %401 = vmatprep.subr.mxu0 0.0
    %402 = vmatpush1.msra.mxu0 0.0
    %403 = vmatprep.subr.mxu0 0.0
    %404 = vmatpush1.msra.mxu0 0.0
    %405 = vmatprep.subr.mxu0 0.0
    %406 = vmatpush1.msra.mxu0 0.0
    %407 = vmatprep.subr.mxu0 0.0
    %408 = vmatpush1.msra.mxu0 0.0
    %409 = vmatprep.subr.mxu0 0.0
    %410 = vmatpush1.msra.mxu0 0.0
    %411 = vmatprep.subr.mxu0 0.0
    %412 = vmatpush1.msra.mxu0 0.0
    %413 = vmatprep.subr.mxu0 0.0
    %414 = vmatpush1.msra.mxu0 0.0
    %415 = vmatprep.subr.mxu0 0.0
    %416 = vmatpush1.msra.mxu0 0.0
    %417 = vmatprep.subr.mxu0 0.0
    %418 = vmatpush1.msra.mxu0 0.0
    %419 = vmatprep.subr.mxu0 0.0
    %420 = vmatpush1.msra.mxu0 0.0
    %421 = vmatprep.subr.mxu0 0.0
    %422 = vmatpush1.msra.mxu0 0.0
    %423 = vmatprep.subr.mxu0 0.0
    %424 = vmatpush1.msra.mxu0 0.0
    %425 = vmatprep.subr.mxu0 0.0
    %426 = vmatpush1.msra.mxu0 %v387
    %427 = vmatprep.subr.mxu0 0.0
    %428 = vmatpush1.msra.mxu0 %v386
    %429 = vmatprep.subr.mxu0 0.0
    %430 = vmatpush1.msra.mxu0 %v385
    %431 = vmatprep.subr.mxu0 0.0
    %432 = vmatpush1.msra.mxu0 %v384
    %433 = vmatprep.subr.mxu0 0.0
    %434 = vmatpush2.msra.mxu0 0.0
    %435 = vmatprep.subr.mxu0 0.0
    %436 = vmatpush2.msra.mxu0 0.0
    %437 = vmatprep.subr.mxu0 0.0
    %438 = vmatpush2.msra.mxu0 0.0
    %439 = vmatprep.subr.mxu0 0.0
    %440 = vmatpush2.msra.mxu0 0.0
    %441 = vmatprep.subr.mxu0 0.0
    %442 = vmatpush2.msra.mxu0 0.0
    %443 = vmatprep.subr.mxu0 0.0
    %444 = vmatpush2.msra.mxu0 0.0
    %445 = vmatprep.subr.mxu0 0.0
    %446 = vmatpush2.msra.mxu0 0.0
    %447 = vmatprep.subr.mxu0 0.0
    %448 = vmatpush2.msra.mxu0 0.0
    %449 = vmatprep.subr.mxu0 0.0
    %450 = vmatpush2.msra.mxu0 0.0
    %451 = vmatprep.subr.mxu0 0.0
    %452 = vmatpush2.msra.mxu0 0.0
    %453 = vmatprep.subr.mxu0 0.0
    %454 = vmatpush2.msra.mxu0 0.0
    %455 = vmatprep.subr.mxu0 0.0
    %456 = vmatpush2.msra.mxu0 0.0
    %457 = vmatprep.subr.mxu0 0.0
    %458 = vmatpush2.msra.mxu0 0.0
    %459 = vmatprep.subr.mxu0 0.0
    %460 = vmatpush2.msra.mxu0 0.0
    %461 = vmatprep.subr.mxu0 0.0
    %462 = vmatpush2.msra.mxu0 0.0
    %463 = vmatprep.subr.mxu0 0.0
    %464 = vmatpush2.msra.mxu0 0.0
    %465 = vmatprep.mubr.f32.mxu0 0.0
    %466 = vmatmul.mubr.f32.gmra.mxu0 %v396
    %v467 = vpop.f32.mrf.mxu0
    %v468 = vadd.f32 %v393, %v467
    %v469 = vpop.f32.mrf.mxu0
    %470 = vmatprep.mubr.f32.mxu0 0.0
    %471 = vmatmul.mubr.f32.gmra.mxu0 %v399
    %v472 = vpop.f32.mrf.mxu0
    %v473 = vadd.f32 %v393, %v472
    %v474 = vpop.f32.mrf.mxu0
    %475 = vdwg.mxu0
    %484 = vrot.lane.b32.xlu0 %v366, 32
    %v485 = vpop.permute.xlu0 %484
    %486 = vrot.lane.b32.xlu0 %v367, 32
    %v487 = vpop.permute.xlu0 %486
    %488 = vrot.lane.b32.xlu0 %v368, 32
    %v489 = vpop.permute.xlu0 %488
    %490 = vrot.lane.b32.xlu0 %v369, 32
    %v491 = vpop.permute.xlu0 %490
    %492 = vrot.lane.b32.xlu0 %v370, 32
    %v493 = vpop.permute.xlu0 %492
    %494 = vrot.lane.b32.xlu0 %v371, 32
    %v495 = vpop.permute.xlu0 %494
    %496 = vrot.lane.b32.xlu0 %v372, 32
    %v497 = vpop.permute.xlu0 %496
    %498 = vrot.lane.b32.xlu0 %v373, 32
    %v499 = vpop.permute.xlu0 %498
    %v508 = vmul.f32 %v468, %v485
    %v509 = vmul.f32 %v473, %v487
    %v510 = vmul.f32 %v468, %v489
    %v511 = vmul.f32 %v473, %v491
    %v512 = vmul.f32 %v468, %v493
    %v513 = vmul.f32 %v473, %v495
    %v514 = vmul.f32 %v468, %v497
    %v515 = vmul.f32 %v473, %v499
    %516 = vrot.lane.b32.xlu0 %v366, 64
    %v517 = vpop.permute.xlu0 %516
    %518 = vrot.lane.b32.xlu0 %v367, 64
    %v519 = vpop.permute.xlu0 %518
    %520 = vrot.lane.b32.xlu0 %v368, 64
    %v521 = vpop.permute.xlu0 %520
    %522 = vrot.lane.b32.xlu0 %v369, 64
    %v523 = vpop.permute.xlu0 %522
    %524 = vrot.lane.b32.xlu0 %v370, 64
    %v525 = vpop.permute.xlu0 %524
    %526 = vrot.lane.b32.xlu0 %v371, 64
    %v527 = vpop.permute.xlu0 %526
    %528 = vrot.lane.b32.xlu0 %v372, 64
    %v529 = vpop.permute.xlu0 %528
    %530 = vrot.lane.b32.xlu0 %v373, 64
    %v531 = vpop.permute.xlu0 %530
    %v540 = vmul.f32 %v468, %v517
    %v541 = vmul.f32 %v473, %v519
    %v542 = vmul.f32 %v468, %v521
    %v543 = vmul.f32 %v473, %v523
    %v544 = vmul.f32 %v468, %v525
    %v545 = vmul.f32 %v473, %v527
    %v546 = vmul.f32 %v468, %v529
    %v547 = vmul.f32 %v473, %v531
    %556 = vrot.lane.b32.xlu0 %v508, 96
    %v557 = vpop.permute.xlu0 %556
    %558 = vrot.lane.b32.xlu0 %v509, 96
    %v559 = vpop.permute.xlu0 %558
    %560 = vrot.lane.b32.xlu0 %v510, 96
    %v561 = vpop.permute.xlu0 %560
    %562 = vrot.lane.b32.xlu0 %v511, 96
    %v563 = vpop.permute.xlu0 %562
    %564 = vrot.lane.b32.xlu0 %v512, 96
    %v565 = vpop.permute.xlu0 %564
    %566 = vrot.lane.b32.xlu0 %v513, 96
    %v567 = vpop.permute.xlu0 %566
    %568 = vrot.lane.b32.xlu0 %v514, 96
    %v569 = vpop.permute.xlu0 %568
    %570 = vrot.lane.b32.xlu0 %v515, 96
    %v571 = vpop.permute.xlu0 %570
    %v573 = vsel %vm322, %v468, 0
    %v576 = vsel %vm322, %v473, 0
    %v578 = vsel %vm322, %v557, 0
    %v580 = vsel %vm322, %v559, 0
    %v582 = vsel %vm322, %v561, 0
    %v584 = vsel %vm322, %v563, 0
    %v586 = vsel %vm322, %v565, 0
    %v588 = vsel %vm322, %v567, 0
    %v590 = vsel %vm322, %v569, 0
    %v592 = vsel %vm322, %v571, 0
    %594 = vmatprep.subr.mxu0 0.0
    %595 = vmatpush1.xpose.msra.mxu0 0.0
    %596 = vmatprep.subr.mxu0 0.0
    %597 = vmatpush1.xpose.msra.mxu0 0.0
    %598 = vmatprep.subr.mxu0 0.0
    %599 = vmatpush1.xpose.msra.mxu0 0.0
    %600 = vmatprep.subr.mxu0 0.0
    %601 = vmatpush1.xpose.msra.mxu0 0.0
    %602 = vmatprep.subr.mxu0 0.0
    %603 = vmatpush1.xpose.msra.mxu0 0.0
    %604 = vmatprep.subr.mxu0 0.0
    %605 = vmatpush1.xpose.msra.mxu0 0.0
    %606 = vmatprep.subr.mxu0 0.0
    %607 = vmatpush1.xpose.msra.mxu0 0.0
    %608 = vmatprep.subr.mxu0 0.0
    %609 = vmatpush1.xpose.msra.mxu0 0.0
    %610 = vmatprep.subr.mxu0 0.0
    %611 = vmatpush1.xpose.msra.mxu0 %v592
    %612 = vmatprep.subr.mxu0 0.0
    %613 = vmatpush1.xpose.msra.mxu0 %v590
    %614 = vmatprep.subr.mxu0 0.0
    %615 = vmatpush1.xpose.msra.mxu0 %v588
    %616 = vmatprep.subr.mxu0 0.0
    %617 = vmatpush1.xpose.msra.mxu0 %v586
    %618 = vmatprep.subr.mxu0 0.0
    %619 = vmatpush1.xpose.msra.mxu0 %v584
    %620 = vmatprep.subr.mxu0 0.0
    %621 = vmatpush1.xpose.msra.mxu0 %v582
    %622 = vmatprep.subr.mxu0 0.0
    %623 = vmatpush1.xpose.msra.mxu0 %v580
    %624 = vmatprep.subr.mxu0 0.0
    %625 = vmatpush1.xpose.msra.mxu0 %v578
    %626 = vmatprep.subr.mxu0 0.0
    %627 = vmatpush2.xpose.msra.mxu0 0.0
    %628 = vmatprep.subr.mxu0 0.0
    %629 = vmatpush2.xpose.msra.mxu0 0.0
    %630 = vmatprep.subr.mxu0 0.0
    %631 = vmatpush2.xpose.msra.mxu0 0.0
    %632 = vmatprep.subr.mxu0 0.0
    %633 = vmatpush2.xpose.msra.mxu0 0.0
    %634 = vmatprep.subr.mxu0 0.0
    %635 = vmatpush2.xpose.msra.mxu0 0.0
    %636 = vmatprep.subr.mxu0 0.0
    %637 = vmatpush2.xpose.msra.mxu0 0.0
    %638 = vmatprep.subr.mxu0 0.0
    %639 = vmatpush2.xpose.msra.mxu0 0.0
    %640 = vmatprep.subr.mxu0 0.0
    %641 = vmatpush2.xpose.msra.mxu0 0.0
    %642 = vmatprep.subr.mxu0 0.0
    %643 = vmatpush2.xpose.msra.mxu0 0.0
    %644 = vmatprep.subr.mxu0 0.0
    %645 = vmatpush2.xpose.msra.mxu0 0.0
    %646 = vmatprep.subr.mxu0 0.0
    %647 = vmatpush2.xpose.msra.mxu0 0.0
    %648 = vmatprep.subr.mxu0 0.0
    %649 = vmatpush2.xpose.msra.mxu0 0.0
    %650 = vmatprep.subr.mxu0 0.0
    %651 = vmatpush2.xpose.msra.mxu0 0.0
    %652 = vmatprep.subr.mxu0 0.0
    %653 = vmatpush2.xpose.msra.mxu0 0.0
    %654 = vmatprep.subr.mxu0 0.0
    %655 = vmatpush2.xpose.msra.mxu0 0.0
    %656 = vmatprep.subr.mxu0 0.0
    %657 = vmatpush2.xpose.msra.mxu0 0.0
    %658 = vmatprep.mubr.f32.mxu0 0.0
    %659 = vmatmul.mubr.f32.gmra.mxu0 %v573
    %v660 = vpop.f32.mrf.mxu0
    %v661 = vadd.f32 %v374, %v660
    %v662 = vpop.f32.mrf.mxu0
    %663 = vmatprep.mubr.f32.mxu0 0.0
    %664 = vmatmul.mubr.f32.gmra.mxu0 %v576
    %v665 = vpop.f32.mrf.mxu0
    %v666 = vadd.f32 %v375, %v665
    %v667 = vpop.f32.mrf.mxu0
    %668 = vdwg.mxu0
    %vm669 = vcmask 523264
    %v670 = vsel %vm669, %v661, -inf
    %671 = vmax.xlane.f32.xlu0 %v670
    %v672 = vpop.xlane.xlu0 %671
    %v673 = vsel %vm669, %v666, -inf
    %674 = vmax.xlane.f32.xlu0 %v673
    %v675 = vpop.xlane.xlu0 %674
    %v676 = vsub.f32 %v661, %v672
    %v677 = vsub.f32 %v666, %v675
    %v678 = vmul.f32 %v676, 1.442695
    %v679 = vpow.pop %v678
    %v680 = vmul.f32 %v677, 1.442695
    %v681 = vpow.pop %v680
    %v683 = vsel %vm669, %v679, 0
    %v686 = vsel %vm669, %v681, 0
    %688 = vmatprep.subr.mxu0 0.0
    %689 = vmatpush1.msra.mxu0 0.0
    %690 = vmatprep.subr.mxu0 0.0
    %691 = vmatpush1.msra.mxu0 0.0
    %692 = vmatprep.subr.mxu0 0.0
    %693 = vmatpush1.msra.mxu0 0.0
    %694 = vmatprep.subr.mxu0 0.0
    %695 = vmatpush1.msra.mxu0 0.0
    %696 = vmatprep.subr.mxu0 0.0
    %697 = vmatpush1.msra.mxu0 0.0
    %698 = vmatprep.subr.mxu0 0.0
    %699 = vmatpush1.msra.mxu0 0.0
    %700 = vmatprep.subr.mxu0 0.0
    %701 = vmatpush1.msra.mxu0 0.0
    %702 = vmatprep.subr.mxu0 0.0
    %703 = vmatpush1.msra.mxu0 0.0
    %704 = vmatprep.subr.mxu0 0.0
    %705 = vmatpush1.msra.mxu0 %v383
    %706 = vmatprep.subr.mxu0 0.0
    %707 = vmatpush1.msra.mxu0 %v382
    %708 = vmatprep.subr.mxu0 0.0
    %709 = vmatpush1.msra.mxu0 %v381
    %710 = vmatprep.subr.mxu0 0.0
    %711 = vmatpush1.msra.mxu0 %v380
    %712 = vmatprep.subr.mxu0 0.0
    %713 = vmatpush1.msra.mxu0 %v379
    %714 = vmatprep.subr.mxu0 0.0
    %715 = vmatpush1.msra.mxu0 %v378
    %716 = vmatprep.subr.mxu0 0.0
    %717 = vmatpush1.msra.mxu0 %v377
    %718 = vmatprep.subr.mxu0 0.0
    %719 = vmatpush1.msra.mxu0 %v376
    %720 = vmatprep.subr.mxu0 0.0
    %721 = vmatpush2.msra.mxu0 0.0
    %722 = vmatprep.subr.mxu0 0.0
    %723 = vmatpush2.msra.mxu0 0.0
    %724 = vmatprep.subr.mxu0 0.0
    %725 = vmatpush2.msra.mxu0 0.0
    %726 = vmatprep.subr.mxu0 0.0
    %727 = vmatpush2.msra.mxu0 0.0
    %728 = vmatprep.subr.mxu0 0.0
    %729 = vmatpush2.msra.mxu0 0.0
    %730 = vmatprep.subr.mxu0 0.0
    %731 = vmatpush2.msra.mxu0 0.0
    %732 = vmatprep.subr.mxu0 0.0
    %733 = vmatpush2.msra.mxu0 0.0
    %734 = vmatprep.subr.mxu0 0.0
    %735 = vmatpush2.msra.mxu0 0.0
    %736 = vmatprep.subr.mxu0 0.0
    %737 = vmatpush2.msra.mxu0 0.0
    %738 = vmatprep.subr.mxu0 0.0
    %739 = vmatpush2.msra.mxu0 0.0
    %740 = vmatprep.subr.mxu0 0.0
    %741 = vmatpush2.msra.mxu0 0.0
    %742 = vmatprep.subr.mxu0 0.0
    %743 = vmatpush2.msra.mxu0 0.0
    %744 = vmatprep.subr.mxu0 0.0
    %745 = vmatpush2.msra.mxu0 0.0
    %746 = vmatprep.subr.mxu0 0.0
    %747 = vmatpush2.msra.mxu0 0.0
    %748 = vmatprep.subr.mxu0 0.0
    %749 = vmatpush2.msra.mxu0 0.0
    %750 = vmatprep.subr.mxu0 0.0
    %751 = vmatpush2.msra.mxu0 0.0
    %752 = vmatprep.mubr.f32.mxu0 0.0
    %753 = vmatmul.mubr.f32.gmra.mxu0 %v683
    %v754 = vpop.f32.mrf.mxu0
    %v755 = vadd.f32 0.0, %v754
    %v756 = vpop.f32.mrf.mxu0
    %757 = vmatprep.mubr.f32.mxu0 0.0
    %758 = vmatmul.mubr.f32.gmra.mxu0 %v686
    %v759 = vpop.f32.mrf.mxu0
    %v760 = vadd.f32 0.0, %v759
    %v761 = vpop.f32.mrf.mxu0
    %762 = vdwg.mxu0
    %v763 = vrcp.pop %v755
    %v764 = vrcp.pop %v760
    %v765 = vmul.f32 %v679, %v763
    %v766 = vmul.f32 %v681, %v764
    %775 = vrot.lane.b32.xlu0 %v540, 64
    %v776 = vpop.permute.xlu0 %775
    %777 = vrot.lane.b32.xlu0 %v541, 64
    %v778 = vpop.permute.xlu0 %777
    %779 = vrot.lane.b32.xlu0 %v542, 64
    %v780 = vpop.permute.xlu0 %779
    %781 = vrot.lane.b32.xlu0 %v543, 64
    %v782 = vpop.permute.xlu0 %781
    %783 = vrot.lane.b32.xlu0 %v544, 64
    %v784 = vpop.permute.xlu0 %783
    %785 = vrot.lane.b32.xlu0 %v545, 64
    %v786 = vpop.permute.xlu0 %785
    %787 = vrot.lane.b32.xlu0 %v546, 64
    %v788 = vpop.permute.xlu0 %787
    %789 = vrot.lane.b32.xlu0 %v547, 64
    %v790 = vpop.permute.xlu0 %789
    %v800 = vsel %vm669, %v765, 0
    %v803 = vsel %vm669, %v766, 0
    %805 = vmatprep.subr.mxu0 0.0
    %806 = vmatpush1.msra.mxu0 0.0
    %807 = vmatprep.subr.mxu0 0.0
    %808 = vmatpush1.msra.mxu0 0.0
    %809 = vmatprep.subr.mxu0 0.0
    %810 = vmatpush1.msra.mxu0 0.0
    %811 = vmatprep.subr.mxu0 0.0
    %812 = vmatpush1.msra.mxu0 0.0
    %813 = vmatprep.subr.mxu0 0.0
    %814 = vmatpush1.msra.mxu0 0.0
    %815 = vmatprep.subr.mxu0 0.0
    %816 = vmatpush1.msra.mxu0 0.0
    %817 = vmatprep.subr.mxu0 0.0
    %818 = vmatpush1.msra.mxu0 0.0
    %819 = vmatprep.subr.mxu0 0.0
    %820 = vmatpush1.msra.mxu0 0.0
    %821 = vmatprep.subr.mxu0 0.0
    %822 = vmatpush1.msra.mxu0 %v790
    %823 = vmatprep.subr.mxu0 0.0
    %824 = vmatpush1.msra.mxu0 %v788
    %825 = vmatprep.subr.mxu0 0.0
    %826 = vmatpush1.msra.mxu0 %v786
    %827 = vmatprep.subr.mxu0 0.0
    %828 = vmatpush1.msra.mxu0 %v784
    %829 = vmatprep.subr.mxu0 0.0
    %830 = vmatpush1.msra.mxu0 %v782
    %831 = vmatprep.subr.mxu0 0.0
    %832 = vmatpush1.msra.mxu0 %v780
    %833 = vmatprep.subr.mxu0 0.0
    %834 = vmatpush1.msra.mxu0 %v778
    %835 = vmatprep.subr.mxu0 0.0
    %836 = vmatpush1.msra.mxu0 %v776
    %837 = vmatprep.subr.mxu0 0.0
    %838 = vmatpush2.msra.mxu0 0.0
    %839 = vmatprep.subr.mxu0 0.0
    %840 = vmatpush2.msra.mxu0 0.0
    %841 = vmatprep.subr.mxu0 0.0
    %842 = vmatpush2.msra.mxu0 0.0
    %843 = vmatprep.subr.mxu0 0.0
    %844 = vmatpush2.msra.mxu0 0.0
    %845 = vmatprep.subr.mxu0 0.0
    %846 = vmatpush2.msra.mxu0 0.0
    %847 = vmatprep.subr.mxu0 0.0
    %848 = vmatpush2.msra.mxu0 0.0
    %849 = vmatprep.subr.mxu0 0.0
    %850 = vmatpush2.msra.mxu0 0.0
    %851 = vmatprep.subr.mxu0 0.0
    %852 = vmatpush2.msra.mxu0 0.0
    %853 = vmatprep.subr.mxu0 0.0
    %854 = vmatpush2.msra.mxu0 0.0
    %855 = vmatprep.subr.mxu0 0.0
    %856 = vmatpush2.msra.mxu0 0.0
    %857 = vmatprep.subr.mxu0 0.0
    %858 = vmatpush2.msra.mxu0 0.0
    %859 = vmatprep.subr.mxu0 0.0
    %860 = vmatpush2.msra.mxu0 0.0
    %861 = vmatprep.subr.mxu0 0.0
    %862 = vmatpush2.msra.mxu0 0.0
    %863 = vmatprep.subr.mxu0 0.0
    %864 = vmatpush2.msra.mxu0 0.0
    %865 = vmatprep.subr.mxu0 0.0
    %866 = vmatpush2.msra.mxu0 0.0
    %867 = vmatprep.subr.mxu0 0.0
    %868 = vmatpush2.msra.mxu0 0.0
    %869 = vmatprep.mubr.f32.mxu0 0.0
    %870 = vmatmul.mubr.f32.gmra.mxu0 %v800
    %v871 = vpop.f32.mrf.mxu0
    %v872 = vadd.f32 0.0, %v871
    %v873 = vpop.f32.mrf.mxu0
    %874 = vmatprep.mubr.f32.mxu0 0.0
    %875 = vmatmul.mubr.f32.gmra.mxu0 %v803
    %v876 = vpop.f32.mrf.mxu0
    %v877 = vadd.f32 0.0, %v876
    %v878 = vpop.f32.mrf.mxu0
    %879 = vdwg.mxu0
    %v880 = vld [vmem:[%s8] sm:$0xff]
    %v881 = vld [vmem:[%s8 + $0x8] sm:$0xff]
    %v882 = vld [vmem:[%s8 + $0x10] sm:$0xff]
    %v883 = vld [vmem:[%s8 + $0x18] sm:$0xff]
    %v884 = vld [vmem:[%s9] sm:$0x1]
    %v886 = vlaneseq
    %v887 = vshrl.u32 %v886, 7
    %v888 = vsub.s32 0, %v887
    %v889 = vrot.slane %v884, %v888
    %v892 = vsel %vm322, %v872, 0
    %v895 = vsel %vm322, %v877, 0
    %897 = vmatprep.subr.mxu0 0.0
    %898 = vmatpush1.msra.mxu0 0.0
    %899 = vmatprep.subr.mxu0 0.0
    %900 = vmatpush1.msra.mxu0 0.0
    %901 = vmatprep.subr.mxu0 0.0
    %902 = vmatpush1.msra.mxu0 0.0
    %903 = vmatprep.subr.mxu0 0.0
    %904 = vmatpush1.msra.mxu0 0.0
    %905 = vmatprep.subr.mxu0 0.0
    %906 = vmatpush1.msra.mxu0 0.0
    %907 = vmatprep.subr.mxu0 0.0
    %908 = vmatpush1.msra.mxu0 0.0
    %909 = vmatprep.subr.mxu0 0.0
    %910 = vmatpush1.msra.mxu0 0.0
    %911 = vmatprep.subr.mxu0 0.0
    %912 = vmatpush1.msra.mxu0 0.0
    %913 = vmatprep.subr.mxu0 0.0
    %914 = vmatpush1.msra.mxu0 0.0
    %915 = vmatprep.subr.mxu0 0.0
    %916 = vmatpush1.msra.mxu0 0.0
    %917 = vmatprep.subr.mxu0 0.0
    %918 = vmatpush1.msra.mxu0 0.0
    %919 = vmatprep.subr.mxu0 0.0
    %920 = vmatpush1.msra.mxu0 0.0
    %921 = vmatprep.subr.mxu0 0.0
    %922 = vmatpush1.msra.mxu0 %v883
    %923 = vmatprep.subr.mxu0 0.0
    %924 = vmatpush1.msra.mxu0 %v882
    %925 = vmatprep.subr.mxu0 0.0
    %926 = vmatpush1.msra.mxu0 %v881
    %927 = vmatprep.subr.mxu0 0.0
    %928 = vmatpush1.msra.mxu0 %v880
    %929 = vmatprep.subr.mxu0 0.0
    %930 = vmatpush2.msra.mxu0 0.0
    %931 = vmatprep.subr.mxu0 0.0
    %932 = vmatpush2.msra.mxu0 0.0
    %933 = vmatprep.subr.mxu0 0.0
    %934 = vmatpush2.msra.mxu0 0.0
    %935 = vmatprep.subr.mxu0 0.0
    %936 = vmatpush2.msra.mxu0 0.0
    %937 = vmatprep.subr.mxu0 0.0
    %938 = vmatpush2.msra.mxu0 0.0
    %939 = vmatprep.subr.mxu0 0.0
    %940 = vmatpush2.msra.mxu0 0.0
    %941 = vmatprep.subr.mxu0 0.0
    %942 = vmatpush2.msra.mxu0 0.0
    %943 = vmatprep.subr.mxu0 0.0
    %944 = vmatpush2.msra.mxu0 0.0
    %945 = vmatprep.subr.mxu0 0.0
    %946 = vmatpush2.msra.mxu0 0.0
    %947 = vmatprep.subr.mxu0 0.0
    %948 = vmatpush2.msra.mxu0 0.0
    %949 = vmatprep.subr.mxu0 0.0
    %950 = vmatpush2.msra.mxu0 0.0
    %951 = vmatprep.subr.mxu0 0.0
    %952 = vmatpush2.msra.mxu0 0.0
    %953 = vmatprep.subr.mxu0 0.0
    %954 = vmatpush2.msra.mxu0 0.0
    %955 = vmatprep.subr.mxu0 0.0
    %956 = vmatpush2.msra.mxu0 0.0
    %957 = vmatprep.subr.mxu0 0.0
    %958 = vmatpush2.msra.mxu0 0.0
    %959 = vmatprep.subr.mxu0 0.0
    %960 = vmatpush2.msra.mxu0 0.0
    %961 = vmatprep.mubr.f32.mxu0 0.0
    %962 = vmatmul.mubr.f32.gmra.mxu0 %v892
    %v963 = vpop.f32.mrf.mxu0
    %v964 = vadd.f32 %v889, %v963
    %v965 = vpop.f32.mrf.mxu0
    %966 = vmatprep.mubr.f32.mxu0 0.0
    %967 = vmatmul.mubr.f32.gmra.mxu0 %v895
    %v968 = vpop.f32.mrf.mxu0
    %v969 = vadd.f32 %v889, %v968
    %v970 = vpop.f32.mrf.mxu0
    %971 = vdwg.mxu0
    %v972 = vadd.f32 %v364, %v964
    %v973 = vadd.f32 %v365, %v969
    %v974 = vld [vmem:[#allocation11] sm:$0x1]
    %v975 = vld [vmem:[#allocation13] sm:$0x1]
    %v976 = vsel %vm322, %v972, 0.0
    %977 = vadd.xlane.f32.xlu0 %v976
    %v978 = vpop.xlane.xlu0 %977
    %v979 = vsel %vm322, %v973, 0.0
    %980 = vadd.xlane.f32.xlu0 %v979
    %v981 = vpop.xlane.xlu0 %980
    %v982 = vmul.f32 %v978, %v329
    %v983 = vmul.f32 %v981, %v329
    %v984 = vsub.f32 %v972, %v982
    %v985 = vsub.f32 %v973, %v983
    %v986 = vmul.f32 %v984, %v984
    %v987 = vmul.f32 %v985, %v985
    %v988 = vsel %vm322, %v986, 0.0
    %989 = vadd.xlane.f32.xlu0 %v988
    %v990 = vpop.xlane.xlu0 %989
    %v991 = vsel %vm322, %v987, 0.0
    %992 = vadd.xlane.f32.xlu0 %v991
    %v993 = vpop.xlane.xlu0 %992
    %v994 = vmul.f32 %v990, %v329
    %v995 = vmul.f32 %v993, %v329
    %v996 = vadd.f32 %v994, 1e-05
    %v997 = vadd.f32 %v995, 1e-05
    %v998 = vrsqrt.pop %v996
    %v999 = vrsqrt.pop %v997
    %v1000 = vmul.f32 %v984, %v998
    %v1001 = vmul.f32 %v985, %v999
    %v1003 = vlaneseq
    %v1004 = vshrl.u32 %v1003, 7
    %v1005 = vsub.s32 0, %v1004
    %v1006 = vrot.slane %v974, %v1005
    %v1008 = vmul.f32 %v1000, %v1006
    %v1009 = vmul.f32 %v1001, %v1006
    %v1011 = vlaneseq
    %v1012 = vshrl.u32 %v1011, 7
    %v1013 = vsub.s32 0, %v1012
    %v1014 = vrot.slane %v975, %v1013
    %v1016 = vadd.f32 %v1008, %v1014
    %v1017 = vadd.f32 %v1009, %v1014
    %v1018 = vld [vmem:[%s12] sm:$0xff]
    %v1019 = vld [vmem:[%s12 + $0x8] sm:$0xff]
    %v1020 = vld [vmem:[%s12 + $0x10] sm:$0xff]
    %v1021 = vld [vmem:[%s12 + $0x18] sm:$0xff]
    %v1022 = vld [vmem:[#allocation14] sm:$0x1]
    %v1024 = vlaneseq
    %v1025 = vshrl.u32 %v1024, 7
    %v1026 = vsub.s32 0, %v1025
    %v1027 = vrot.slane %v1022, %v1026
    %v1030 = vsel %vm322, %v1016, 0
    %v1033 = vsel %vm322, %v1017, 0
    %1035 = vmatprep.subr.mxu0 0.0
    %1036 = vmatpush1.msra.mxu0 0.0
    %1037 = vmatprep.subr.mxu0 0.0
    %1038 = vmatpush1.msra.mxu0 0.0
    %1039 = vmatprep.subr.mxu0 0.0
    %1040 = vmatpush1.msra.mxu0 0.0
    %1041 = vmatprep.subr.mxu0 0.0
    %1042 = vmatpush1.msra.mxu0 0.0
    %1043 = vmatprep.subr.mxu0 0.0
    %1044 = vmatpush1.msra.mxu0 0.0
    %1045 = vmatprep.subr.mxu0 0.0
    %1046 = vmatpush1.msra.mxu0 0.0
    %1047 = vmatprep.subr.mxu0 0.0
    %1048 = vmatpush1.msra.mxu0 0.0
    %1049 = vmatprep.subr.mxu0 0.0
    %1050 = vmatpush1.msra.mxu0 0.0
    %1051 = vmatprep.subr.mxu0 0.0
    %1052 = vmatpush1.msra.mxu0 0.0
    %1053 = vmatprep.subr.mxu0 0.0
    %1054 = vmatpush1.msra.mxu0 0.0
    %1055 = vmatprep.subr.mxu0 0.0
    %1056 = vmatpush1.msra.mxu0 0.0
    %1057 = vmatprep.subr.mxu0 0.0
    %1058 = vmatpush1.msra.mxu0 0.0
    %1059 = vmatprep.subr.mxu0 0.0
    %1060 = vmatpush1.msra.mxu0 %v1021
    %1061 = vmatprep.subr.mxu0 0.0
    %1062 = vmatpush1.msra.mxu0 %v1020
    %1063 = vmatprep.subr.mxu0 0.0
    %1064 = vmatpush1.msra.mxu0 %v1019
    %1065 = vmatprep.subr.mxu0 0.0
    %1066 = vmatpush1.msra.mxu0 %v1018
    %1067 = vmatprep.subr.mxu0 0.0
    %1068 = vmatpush2.msra.mxu0 0.0
    %1069 = vmatprep.subr.mxu0 0.0
    %1070 = vmatpush2.msra.mxu0 0.0
    %1071 = vmatprep.subr.mxu0 0.0
    %1072 = vmatpush2.msra.mxu0 0.0
    %1073 = vmatprep.subr.mxu0 0.0
    %1074 = vmatpush2.msra.mxu0 0.0
    %1075 = vmatprep.subr.mxu0 0.0
    %1076 = vmatpush2.msra.mxu0 0.0
    %1077 = vmatprep.subr.mxu0 0.0
    %1078 = vmatpush2.msra.mxu0 0.0
    %1079 = vmatprep.subr.mxu0 0.0
    %1080 = vmatpush2.msra.mxu0 0.0
    %1081 = vmatprep.subr.mxu0 0.0
    %1082 = vmatpush2.msra.mxu0 0.0
    %1083 = vmatprep.subr.mxu0 0.0
    %1084 = vmatpush2.msra.mxu0 0.0
    %1085 = vmatprep.subr.mxu0 0.0
    %1086 = vmatpush2.msra.mxu0 0.0
    %1087 = vmatprep.subr.mxu0 0.0
    %1088 = vmatpush2.msra.mxu0 0.0
    %1089 = vmatprep.subr.mxu0 0.0
    %1090 = vmatpush2.msra.mxu0 0.0
    %1091 = vmatprep.subr.mxu0 0.0
    %1092 = vmatpush2.msra.mxu0 0.0
    %1093 = vmatprep.subr.mxu0 0.0
    %1094 = vmatpush2.msra.mxu0 0.0
    %1095 = vmatprep.subr.mxu0 0.0
    %1096 = vmatpush2.msra.mxu0 0.0
    %1097 = vmatprep.subr.mxu0 0.0
    %1098 = vmatpush2.msra.mxu0 0.0
    %1099 = vmatprep.mubr.f32.mxu0 0.0
    %1100 = vmatmul.mubr.f32.gmra.mxu0 %v1030
    %v1101 = vpop.f32.mrf.mxu0
    %v1102 = vadd.f32 %v1027, %v1101
    %v1103 = vpop.f32.mrf.mxu0
    %1104 = vmatprep.mubr.f32.mxu0 0.0
    %1105 = vmatmul.mubr.f32.gmra.mxu0 %v1033
    %v1106 = vpop.f32.mrf.mxu0
    %v1107 = vadd.f32 %v1027, %v1106
    %v1108 = vpop.f32.mrf.mxu0
    %1109 = vdwg.mxu0
    %v1110 = vmax.f32 %v1102, 0.0
    %v1111 = vmax.f32 %v1107, 0.0
    %v1112 = vld [vmem:[%s14] sm:$0xff]
    %v1113 = vld [vmem:[%s14 + $0x8] sm:$0xff]
    %v1114 = vld [vmem:[%s14 + $0x10] sm:$0xff]
    %v1115 = vld [vmem:[%s14 + $0x18] sm:$0xff]
    %v1116 = vld [vmem:[%s14 + $0x20] sm:$0xff]
    %v1117 = vld [vmem:[%s14 + $0x28] sm:$0xff]
    %v1118 = vld [vmem:[%s14 + $0x30] sm:$0xff]
    %v1119 = vld [vmem:[%s14 + $0x38] sm:$0xff]
    %v1120 = vld [vmem:[#allocation16] sm:$0x1]
    %v1122 = vlaneseq
    %v1123 = vshrl.u32 %v1122, 7
    %v1124 = vsub.s32 0, %v1123
    %v1125 = vrot.slane %v1120, %v1124
    %v1128 = vsel %vm669, %v1110, 0
    %v1131 = vsel %vm669, %v1111, 0
    %1133 = vmatprep.subr.mxu0 0.0
    %1134 = vmatpush1.msra.mxu0 0.0
    %1135 = vmatprep.subr.mxu0 0.0
    %1136 = vmatpush1.msra.mxu0 0.0
    %1137 = vmatprep.subr.mxu0 0.0
    %1138 = vmatpush1.msra.mxu0 0.0
    %1139 = vmatprep.subr.mxu0 0.0
    %1140 = vmatpush1.msra.mxu0 0.0
    %1141 = vmatprep.subr.mxu0 0.0
    %1142 = vmatpush1.msra.mxu0 0.0
    %1143 = vmatprep.subr.mxu0 0.0
    %1144 = vmatpush1.msra.mxu0 0.0
    %1145 = vmatprep.subr.mxu0 0.0
    %1146 = vmatpush1.msra.mxu0 0.0
    %1147 = vmatprep.subr.mxu0 0.0
    %1148 = vmatpush1.msra.mxu0 0.0
    %1149 = vmatprep.subr.mxu0 0.0
    %1150 = vmatpush1.msra.mxu0 %v1119
    %1151 = vmatprep.subr.mxu0 0.0
    %1152 = vmatpush1.msra.mxu0 %v1118
    %1153 = vmatprep.subr.mxu0 0.0
    %1154 = vmatpush1.msra.mxu0 %v1117
    %1155 = vmatprep.subr.mxu0 0.0
    %1156 = vmatpush1.msra.mxu0 %v1116
    %1157 = vmatprep.subr.mxu0 0.0
    %1158 = vmatpush1.msra.mxu0 %v1115
    %1159 = vmatprep.subr.mxu0 0.0
    %1160 = vmatpush1.msra.mxu0 %v1114
    %1161 = vmatprep.subr.mxu0 0.0
    %1162 = vmatpush1.msra.mxu0 %v1113
    %1163 = vmatprep.subr.mxu0 0.0
    %1164 = vmatpush1.msra.mxu0 %v1112
    %1165 = vmatprep.subr.mxu0 0.0
    %1166 = vmatpush2.msra.mxu0 0.0
    %1167 = vmatprep.subr.mxu0 0.0
    %1168 = vmatpush2.msra.mxu0 0.0
    %1169 = vmatprep.subr.mxu0 0.0
    %1170 = vmatpush2.msra.mxu0 0.0
    %1171 = vmatprep.subr.mxu0 0.0
    %1172 = vmatpush2.msra.mxu0 0.0
    %1173 = vmatprep.subr.mxu0 0.0
    %1174 = vmatpush2.msra.mxu0 0.0
    %1175 = vmatprep.subr.mxu0 0.0
    %1176 = vmatpush2.msra.mxu0 0.0
    %1177 = vmatprep.subr.mxu0 0.0
    %1178 = vmatpush2.msra.mxu0 0.0
    %1179 = vmatprep.subr.mxu0 0.0
    %1180 = vmatpush2.msra.mxu0 0.0
    %1181 = vmatprep.subr.mxu0 0.0
    %1182 = vmatpush2.msra.mxu0 0.0
    %1183 = vmatprep.subr.mxu0 0.0
    %1184 = vmatpush2.msra.mxu0 0.0
    %1185 = vmatprep.subr.mxu0 0.0
    %1186 = vmatpush2.msra.mxu0 0.0
    %1187 = vmatprep.subr.mxu0 0.0
    %1188 = vmatpush2.msra.mxu0 0.0
    %1189 = vmatprep.subr.mxu0 0.0
    %1190 = vmatpush2.msra.mxu0 0.0
    %1191 = vmatprep.subr.mxu0 0.0
    %1192 = vmatpush2.msra.mxu0 0.0
    %1193 = vmatprep.subr.mxu0 0.0
    %1194 = vmatpush2.msra.mxu0 0.0
    %1195 = vmatprep.subr.mxu0 0.0
    %1196 = vmatpush2.msra.mxu0 0.0
    %1197 = vmatprep.mubr.f32.mxu0 0.0
    %1198 = vmatmul.mubr.f32.gmra.mxu0 %v1128
    %v1199 = vpop.f32.mrf.mxu0
    %v1200 = vadd.f32 %v1125, %v1199
    %v1201 = vpop.f32.mrf.mxu0
    %1202 = vmatprep.mubr.f32.mxu0 0.0
    %1203 = vmatmul.mubr.f32.gmra.mxu0 %v1131
    %v1204 = vpop.f32.mrf.mxu0
    %v1205 = vadd.f32 %v1125, %v1204
    %v1206 = vpop.f32.mrf.mxu0
    %1207 = vdwg.mxu0
    %v1208 = vadd.f32 %v1016, %v1200
    %v1209 = vadd.f32 %v1017, %v1205
    %v1210 = vld [vmem:[#allocation17] sm:$0x1]
    %v1211 = vld [vmem:[#allocation19] sm:$0x1]
    %v1212 = vsel %vm322, %v1208, 0.0
    %1213 = vadd.xlane.f32.xlu0 %v1212
    %v1214 = vpop.xlane.xlu0 %1213
    %v1215 = vsel %vm322, %v1209, 0.0
    %1216 = vadd.xlane.f32.xlu0 %v1215
    %v1217 = vpop.xlane.xlu0 %1216
    %v1218 = vmul.f32 %v1214, %v329
    %v1219 = vmul.f32 %v1217, %v329
    %v1220 = vsub.f32 %v1208, %v1218
    %v1221 = vsub.f32 %v1209, %v1219
    %v1222 = vmul.f32 %v1220, %v1220
    %v1223 = vmul.f32 %v1221, %v1221
    %v1224 = vsel %vm322, %v1222, 0.0
    %1225 = vadd.xlane.f32.xlu0 %v1224
    %v1226 = vpop.xlane.xlu0 %1225
    %v1227 = vsel %vm322, %v1223, 0.0
    %1228 = vadd.xlane.f32.xlu0 %v1227
    %v1229 = vpop.xlane.xlu0 %1228
    %v1230 = vmul.f32 %v1226, %v329
    %v1231 = vmul.f32 %v1229, %v329
    %v1232 = vadd.f32 %v1230, 1e-05
    %v1233 = vadd.f32 %v1231, 1e-05
    %v1234 = vrsqrt.pop %v1232
    %v1235 = vrsqrt.pop %v1233
    %v1236 = vmul.f32 %v1220, %v1234
    %v1237 = vmul.f32 %v1221, %v1235
    %v1239 = vlaneseq
    %v1240 = vshrl.u32 %v1239, 7
    %v1241 = vsub.s32 0, %v1240
    %v1242 = vrot.slane %v1210, %v1241
    %v1244 = vmul.f32 %v1236, %v1242
    %v1245 = vmul.f32 %v1237, %v1242
    %v1247 = vlaneseq
    %v1248 = vshrl.u32 %v1247, 7
    %v1249 = vsub.s32 0, %v1248
    %v1250 = vrot.slane %v1211, %v1249
    %v1252 = vadd.f32 %v1244, %v1250
    %v1253 = vadd.f32 %v1245, %v1250
    %s1254 = scalar_lea.vmem %s6, 32
    %v1255 = vld [vmem:[%s1254] sm:$0xff]
    %v1256 = vld [vmem:[%s1254 + $0x8] sm:$0xff]
    %v1257 = vld [vmem:[%s1254 + $0x10] sm:$0xff]
    %v1258 = vld [vmem:[%s1254 + $0x18] sm:$0xff]
    %s1259 = scalar_lea.vmem %s7, 1
    %v1260 = vld [vmem:[%s1259] sm:$0x1]
    %v1262 = vlaneseq
    %v1263 = vshrl.u32 %v1262, 7
    %v1264 = vsub.s32 0, %v1263
    %v1265 = vrot.slane %v1260, %v1264
    %v1268 = vsel %vm322, %v1252, 0
    %v1271 = vsel %vm322, %v1253, 0
    %1273 = vmatprep.subr.mxu0 0.0
    %1274 = vmatpush1.msra.mxu0 0.0
    %1275 = vmatprep.subr.mxu0 0.0
    %1276 = vmatpush1.msra.mxu0 0.0
    %1277 = vmatprep.subr.mxu0 0.0
    %1278 = vmatpush1.msra.mxu0 0.0
    %1279 = vmatprep.subr.mxu0 0.0
    %1280 = vmatpush1.msra.mxu0 0.0
    %1281 = vmatprep.subr.mxu0 0.0
    %1282 = vmatpush1.msra.mxu0 0.0
    %1283 = vmatprep.subr.mxu0 0.0
    %1284 = vmatpush1.msra.mxu0 0.0
    %1285 = vmatprep.subr.mxu0 0.0
    %1286 = vmatpush1.msra.mxu0 0.0
    %1287 = vmatprep.subr.mxu0 0.0
    %1288 = vmatpush1.msra.mxu0 0.0
    %1289 = vmatprep.subr.mxu0 0.0
    %1290 = vmatpush1.msra.mxu0 0.0
    %1291 = vmatprep.subr.mxu0 0.0
    %1292 = vmatpush1.msra.mxu0 0.0
    %1293 = vmatprep.subr.mxu0 0.0
    %1294 = vmatpush1.msra.mxu0 0.0
    %1295 = vmatprep.subr.mxu0 0.0
    %1296 = vmatpush1.msra.mxu0 0.0
    %1297 = vmatprep.subr.mxu0 0.0
    %1298 = vmatpush1.msra.mxu0 %v1258
    %1299 = vmatprep.subr.mxu0 0.0
    %1300 = vmatpush1.msra.mxu0 %v1257
    %1301 = vmatprep.subr.mxu0 0.0
    %1302 = vmatpush1.msra.mxu0 %v1256
    %1303 = vmatprep.subr.mxu0 0.0
    %1304 = vmatpush1.msra.mxu0 %v1255
    %1305 = vmatprep.subr.mxu0 0.0
    %1306 = vmatpush2.msra.mxu0 0.0
    %1307 = vmatprep.subr.mxu0 0.0
    %1308 = vmatpush2.msra.mxu0 0.0
    %1309 = vmatprep.subr.mxu0 0.0
    %1310 = vmatpush2.msra.mxu0 0.0
    %1311 = vmatprep.subr.mxu0 0.0
    %1312 = vmatpush2.msra.mxu0 0.0
    %1313 = vmatprep.subr.mxu0 0.0
    %1314 = vmatpush2.msra.mxu0 0.0
    %1315 = vmatprep.subr.mxu0 0.0
    %1316 = vmatpush2.msra.mxu0 0.0
    %1317 = vmatprep.subr.mxu0 0.0
    %1318 = vmatpush2.msra.mxu0 0.0
    %1319 = vmatprep.subr.mxu0 0.0
    %1320 = vmatpush2.msra.mxu0 0.0
    %1321 = vmatprep.subr.mxu0 0.0
    %1322 = vmatpush2.msra.mxu0 0.0
    %1323 = vmatprep.subr.mxu0 0.0
    %1324 = vmatpush2.msra.mxu0 0.0
    %1325 = vmatprep.subr.mxu0 0.0
    %1326 = vmatpush2.msra.mxu0 0.0
    %1327 = vmatprep.subr.mxu0 0.0
    %1328 = vmatpush2.msra.mxu0 0.0
    %1329 = vmatprep.subr.mxu0 0.0
    %1330 = vmatpush2.msra.mxu0 0.0
    %1331 = vmatprep.subr.mxu0 0.0
    %1332 = vmatpush2.msra.mxu0 0.0
    %1333 = vmatprep.subr.mxu0 0.0
    %1334 = vmatpush2.msra.mxu0 0.0
    %1335 = vmatprep.subr.mxu0 0.0
    %1336 = vmatpush2.msra.mxu0 0.0
    %1337 = vmatprep.mubr.f32.mxu0 0.0
    %1338 = vmatmul.mubr.f32.gmra.mxu0 %v1268
    %v1339 = vpop.f32.mrf.mxu0
    %v1340 = vadd.f32 %v1265, %v1339
    %v1341 = vpop.f32.mrf.mxu0
    %1342 = vmatprep.mubr.f32.mxu0 0.0
    %1343 = vmatmul.mubr.f32.gmra.mxu0 %v1271
    %v1344 = vpop.f32.mrf.mxu0
    %v1345 = vadd.f32 %v1265, %v1344
    %v1346 = vpop.f32.mrf.mxu0
    %1347 = vdwg.mxu0
    %v1348 = vmul.f32 %v1340, %v485
    %v1349 = vmul.f32 %v1345, %v487
    %v1350 = vmul.f32 %v1340, %v489
    %v1351 = vmul.f32 %v1345, %v491
    %v1352 = vmul.f32 %v1340, %v493
    %v1353 = vmul.f32 %v1345, %v495
    %v1354 = vmul.f32 %v1340, %v497
    %v1355 = vmul.f32 %v1345, %v499
    %v1356 = vmul.f32 %v1340, %v517
    %v1357 = vmul.f32 %v1345, %v519
    %v1358 = vmul.f32 %v1340, %v521
    %v1359 = vmul.f32 %v1345, %v523
    %v1360 = vmul.f32 %v1340, %v525
    %v1361 = vmul.f32 %v1345, %v527
    %v1362 = vmul.f32 %v1340, %v529
    %v1363 = vmul.f32 %v1345, %v531
    %1372 = vrot.lane.b32.xlu0 %v1348, 96
    %v1373 = vpop.permute.xlu0 %1372
    %1374 = vrot.lane.b32.xlu0 %v1349, 96
    %v1375 = vpop.permute.xlu0 %1374
    %1376 = vrot.lane.b32.xlu0 %v1350, 96
    %v1377 = vpop.permute.xlu0 %1376
    %1378 = vrot.lane.b32.xlu0 %v1351, 96
    %v1379 = vpop.permute.xlu0 %1378
    %1380 = vrot.lane.b32.xlu0 %v1352, 96
    %v1381 = vpop.permute.xlu0 %1380
    %1382 = vrot.lane.b32.xlu0 %v1353, 96
    %v1383 = vpop.permute.xlu0 %1382
    %1384 = vrot.lane.b32.xlu0 %v1354, 96
    %v1385 = vpop.permute.xlu0 %1384
    %1386 = vrot.lane.b32.xlu0 %v1355, 96
    %v1387 = vpop.permute.xlu0 %1386
    %v1389 = vsel %vm322, %v1340, 0
    %v1392 = vsel %vm322, %v1345, 0
    %v1394 = vsel %vm322, %v1373, 0
    %v1396 = vsel %vm322, %v1375, 0
    %v1398 = vsel %vm322, %v1377, 0
    %v1400 = vsel %vm322, %v1379, 0
    %v1402 = vsel %vm322, %v1381, 0
    %v1404 = vsel %vm322, %v1383, 0
    %v1406 = vsel %vm322, %v1385, 0
    %v1408 = vsel %vm322, %v1387, 0
    %1410 = vmatprep.subr.mxu0 0.0
    %1411 = vmatpush1.xpose.msra.mxu0 0.0
    %1412 = vmatprep.subr.mxu0 0.0
    %1413 = vmatpush1.xpose.msra.mxu0 0.0
    %1414 = vmatprep.subr.mxu0 0.0
    %1415 = vmatpush1.xpose.msra.mxu0 0.0
    %1416 = vmatprep.subr.mxu0 0.0
    %1417 = vmatpush1.xpose.msra.mxu0 0.0
    %1418 = vmatprep.subr.mxu0 0.0
    %1419 = vmatpush1.xpose.msra.mxu0 0.0
    %1420 = vmatprep.subr.mxu0 0.0
    %1421 = vmatpush1.xpose.msra.mxu0 0.0
    %1422 = vmatprep.subr.mxu0 0.0
    %1423 = vmatpush1.xpose.msra.mxu0 0.0
    %1424 = vmatprep.subr.mxu0 0.0
    %1425 = vmatpush1.xpose.msra.mxu0 0.0
    %1426 = vmatprep.subr.mxu0 0.0
    %1427 = vmatpush1.xpose.msra.mxu0 %v1408
    %1428 = vmatprep.subr.mxu0 0.0
    %1429 = vmatpush1.xpose.msra.mxu0 %v1406
    %1430 = vmatprep.subr.mxu0 0.0
    %1431 = vmatpush1.xpose.msra.mxu0 %v1404
    %1432 = vmatprep.subr.mxu0 0.0
    %1433 = vmatpush1.xpose.msra.mxu0 %v1402
    %1434 = vmatprep.subr.mxu0 0.0
    %1435 = vmatpush1.xpose.msra.mxu0 %v1400
    %1436 = vmatprep.subr.mxu0 0.0
    %1437 = vmatpush1.xpose.msra.mxu0 %v1398
    %1438 = vmatprep.subr.mxu0 0.0
    %1439 = vmatpush1.xpose.msra.mxu0 %v1396
    %1440 = vmatprep.subr.mxu0 0.0
    %1441 = vmatpush1.xpose.msra.mxu0 %v1394
    %1442 = vmatprep.subr.mxu0 0.0
    %1443 = vmatpush2.xpose.msra.mxu0 0.0
    %1444 = vmatprep.subr.mxu0 0.0
    %1445 = vmatpush2.xpose.msra.mxu0 0.0
    %1446 = vmatprep.subr.mxu0 0.0
    %1447 = vmatpush2.xpose.msra.mxu0 0.0
    %1448 = vmatprep.subr.mxu0 0.0
    %1449 = vmatpush2.xpose.msra.mxu0 0.0
    %1450 = vmatprep.subr.mxu0 0.0
    %1451 = vmatpush2.xpose.msra.mxu0 0.0
    %1452 = vmatprep.subr.mxu0 0.0
    %1453 = vmatpush2.xpose.msra.mxu0 0.0
    %1454 = vmatprep.subr.mxu0 0.0
    %1455 = vmatpush2.xpose.msra.mxu0 0.0
    %1456 = vmatprep.subr.mxu0 0.0
    %1457 = vmatpush2.xpose.msra.mxu0 0.0
    %1458 = vmatprep.subr.mxu0 0.0
    %1459 = vmatpush2.xpose.msra.mxu0 0.0
    %1460 = vmatprep.subr.mxu0 0.0
    %1461 = vmatpush2.xpose.msra.mxu0 0.0
    %1462 = vmatprep.subr.mxu0 0.0
    %1463 = vmatpush2.xpose.msra.mxu0 0.0
    %1464 = vmatprep.subr.mxu0 0.0
    %1465 = vmatpush2.xpose.msra.mxu0 0.0
    %1466 = vmatprep.subr.mxu0 0.0
    %1467 = vmatpush2.xpose.msra.mxu0 0.0
    %1468 = vmatprep.subr.mxu0 0.0
    %1469 = vmatpush2.xpose.msra.mxu0 0.0
    %1470 = vmatprep.subr.mxu0 0.0
    %1471 = vmatpush2.xpose.msra.mxu0 0.0
    %1472 = vmatprep.subr.mxu0 0.0
    %1473 = vmatpush2.xpose.msra.mxu0 0.0
    %1474 = vmatprep.mubr.f32.mxu0 0.0
    %1475 = vmatmul.mubr.f32.gmra.mxu0 %v1389
    %v1476 = vpop.f32.mrf.mxu0
    %v1477 = vadd.f32 %v374, %v1476
    %v1478 = vpop.f32.mrf.mxu0
    %1479 = vmatprep.mubr.f32.mxu0 0.0
    %1480 = vmatmul.mubr.f32.gmra.mxu0 %v1392
    %v1481 = vpop.f32.mrf.mxu0
    %v1482 = vadd.f32 %v375, %v1481
    %v1483 = vpop.f32.mrf.mxu0
    %1484 = vdwg.mxu0
    %v1485 = vsel %vm669, %v1477, -inf
    %1486 = vmax.xlane.f32.xlu0 %v1485
    %v1487 = vpop.xlane.xlu0 %1486
    %v1488 = vsel %vm669, %v1482, -inf
    %1489 = vmax.xlane.f32.xlu0 %v1488
    %v1490 = vpop.xlane.xlu0 %1489
    %v1491 = vsub.f32 %v1477, %v1487
    %v1492 = vsub.f32 %v1482, %v1490
    %v1493 = vmul.f32 %v1491, 1.442695
    %v1494 = vpow.pop %v1493
    %v1495 = vmul.f32 %v1492, 1.442695
    %v1496 = vpow.pop %v1495
    %v1498 = vsel %vm669, %v1494, 0
    %v1501 = vsel %vm669, %v1496, 0
    %1503 = vmatprep.subr.mxu0 0.0
    %1504 = vmatpush1.msra.mxu0 0.0
    %1505 = vmatprep.subr.mxu0 0.0
    %1506 = vmatpush1.msra.mxu0 0.0
    %1507 = vmatprep.subr.mxu0 0.0
    %1508 = vmatpush1.msra.mxu0 0.0
    %1509 = vmatprep.subr.mxu0 0.0
    %1510 = vmatpush1.msra.mxu0 0.0
    %1511 = vmatprep.subr.mxu0 0.0
    %1512 = vmatpush1.msra.mxu0 0.0
    %1513 = vmatprep.subr.mxu0 0.0
    %1514 = vmatpush1.msra.mxu0 0.0
    %1515 = vmatprep.subr.mxu0 0.0
    %1516 = vmatpush1.msra.mxu0 0.0
    %1517 = vmatprep.subr.mxu0 0.0
    %1518 = vmatpush1.msra.mxu0 0.0
    %1519 = vmatprep.subr.mxu0 0.0
    %1520 = vmatpush1.msra.mxu0 %v383
    %1521 = vmatprep.subr.mxu0 0.0
    %1522 = vmatpush1.msra.mxu0 %v382
    %1523 = vmatprep.subr.mxu0 0.0
    %1524 = vmatpush1.msra.mxu0 %v381
    %1525 = vmatprep.subr.mxu0 0.0
    %1526 = vmatpush1.msra.mxu0 %v380
    %1527 = vmatprep.subr.mxu0 0.0
    %1528 = vmatpush1.msra.mxu0 %v379
    %1529 = vmatprep.subr.mxu0 0.0
    %1530 = vmatpush1.msra.mxu0 %v378
    %1531 = vmatprep.subr.mxu0 0.0
    %1532 = vmatpush1.msra.mxu0 %v377
    %1533 = vmatprep.subr.mxu0 0.0
    %1534 = vmatpush1.msra.mxu0 %v376
    %1535 = vmatprep.subr.mxu0 0.0
    %1536 = vmatpush2.msra.mxu0 0.0
    %1537 = vmatprep.subr.mxu0 0.0
    %1538 = vmatpush2.msra.mxu0 0.0
    %1539 = vmatprep.subr.mxu0 0.0
    %1540 = vmatpush2.msra.mxu0 0.0
    %1541 = vmatprep.subr.mxu0 0.0
    %1542 = vmatpush2.msra.mxu0 0.0
    %1543 = vmatprep.subr.mxu0 0.0
    %1544 = vmatpush2.msra.mxu0 0.0
    %1545 = vmatprep.subr.mxu0 0.0
    %1546 = vmatpush2.msra.mxu0 0.0
    %1547 = vmatprep.subr.mxu0 0.0
    %1548 = vmatpush2.msra.mxu0 0.0
    %1549 = vmatprep.subr.mxu0 0.0
    %1550 = vmatpush2.msra.mxu0 0.0
    %1551 = vmatprep.subr.mxu0 0.0
    %1552 = vmatpush2.msra.mxu0 0.0
    %1553 = vmatprep.subr.mxu0 0.0
    %1554 = vmatpush2.msra.mxu0 0.0
    %1555 = vmatprep.subr.mxu0 0.0
    %1556 = vmatpush2.msra.mxu0 0.0
    %1557 = vmatprep.subr.mxu0 0.0
    %1558 = vmatpush2.msra.mxu0 0.0
    %1559 = vmatprep.subr.mxu0 0.0
    %1560 = vmatpush2.msra.mxu0 0.0
    %1561 = vmatprep.subr.mxu0 0.0
    %1562 = vmatpush2.msra.mxu0 0.0
    %1563 = vmatprep.subr.mxu0 0.0
    %1564 = vmatpush2.msra.mxu0 0.0
    %1565 = vmatprep.subr.mxu0 0.0
    %1566 = vmatpush2.msra.mxu0 0.0
    %1567 = vmatprep.mubr.f32.mxu0 0.0
    %1568 = vmatmul.mubr.f32.gmra.mxu0 %v1498
    %v1569 = vpop.f32.mrf.mxu0
    %v1570 = vadd.f32 0.0, %v1569
    %v1571 = vpop.f32.mrf.mxu0
    %1572 = vmatprep.mubr.f32.mxu0 0.0
    %1573 = vmatmul.mubr.f32.gmra.mxu0 %v1501
    %v1574 = vpop.f32.mrf.mxu0
    %v1575 = vadd.f32 0.0, %v1574
    %v1576 = vpop.f32.mrf.mxu0
    %1577 = vdwg.mxu0
    %v1578 = vrcp.pop %v1570
    %v1579 = vrcp.pop %v1575
    %v1580 = vmul.f32 %v1494, %v1578
    %v1581 = vmul.f32 %v1496, %v1579
    %1590 = vrot.lane.b32.xlu0 %v1356, 64
    %v1591 = vpop.permute.xlu0 %1590
    %1592 = vrot.lane.b32.xlu0 %v1357, 64
    %v1593 = vpop.permute.xlu0 %1592
    %1594 = vrot.lane.b32.xlu0 %v1358, 64
    %v1595 = vpop.permute.xlu0 %1594
    %1596 = vrot.lane.b32.xlu0 %v1359, 64
    %v1597 = vpop.permute.xlu0 %1596
    %1598 = vrot.lane.b32.xlu0 %v1360, 64
    %v1599 = vpop.permute.xlu0 %1598
    %1600 = vrot.lane.b32.xlu0 %v1361, 64
    %v1601 = vpop.permute.xlu0 %1600
    %1602 = vrot.lane.b32.xlu0 %v1362, 64
    %v1603 = vpop.permute.xlu0 %1602
    %1604 = vrot.lane.b32.xlu0 %v1363, 64
    %v1605 = vpop.permute.xlu0 %1604
    %v1615 = vsel %vm669, %v1580, 0
    %v1618 = vsel %vm669, %v1581, 0
    %1620 = vmatprep.subr.mxu0 0.0
    %1621 = vmatpush1.msra.mxu0 0.0
    %1622 = vmatprep.subr.mxu0 0.0
    %1623 = vmatpush1.msra.mxu0 0.0
    %1624 = vmatprep.subr.mxu0 0.0
    %1625 = vmatpush1.msra.mxu0 0.0
    %1626 = vmatprep.subr.mxu0 0.0
    %1627 = vmatpush1.msra.mxu0 0.0
    %1628 = vmatprep.subr.mxu0 0.0
    %1629 = vmatpush1.msra.mxu0 0.0
    %1630 = vmatprep.subr.mxu0 0.0
    %1631 = vmatpush1.msra.mxu0 0.0
    %1632 = vmatprep.subr.mxu0 0.0
    %1633 = vmatpush1.msra.mxu0 0.0
    %1634 = vmatprep.subr.mxu0 0.0
    %1635 = vmatpush1.msra.mxu0 0.0
    %1636 = vmatprep.subr.mxu0 0.0
    %1637 = vmatpush1.msra.mxu0 %v1605
    %1638 = vmatprep.subr.mxu0 0.0
    %1639 = vmatpush1.msra.mxu0 %v1603
    %1640 = vmatprep.subr.mxu0 0.0
    %1641 = vmatpush1.msra.mxu0 %v1601
    %1642 = vmatprep.subr.mxu0 0.0
    %1643 = vmatpush1.msra.mxu0 %v1599
    %1644 = vmatprep.subr.mxu0 0.0
    %1645 = vmatpush1.msra.mxu0 %v1597
    %1646 = vmatprep.subr.mxu0 0.0
    %1647 = vmatpush1.msra.mxu0 %v1595
    %1648 = vmatprep.subr.mxu0 0.0
    %1649 = vmatpush1.msra.mxu0 %v1593
    %1650 = vmatprep.subr.mxu0 0.0
    %1651 = vmatpush1.msra.mxu0 %v1591
    %1652 = vmatprep.subr.mxu0 0.0
    %1653 = vmatpush2.msra.mxu0 0.0
    %1654 = vmatprep.subr.mxu0 0.0
    %1655 = vmatpush2.msra.mxu0 0.0
    %1656 = vmatprep.subr.mxu0 0.0
    %1657 = vmatpush2.msra.mxu0 0.0
    %1658 = vmatprep.subr.mxu0 0.0
    %1659 = vmatpush2.msra.mxu0 0.0
    %1660 = vmatprep.subr.mxu0 0.0
    %1661 = vmatpush2.msra.mxu0 0.0
    %1662 = vmatprep.subr.mxu0 0.0
    %1663 = vmatpush2.msra.mxu0 0.0
    %1664 = vmatprep.subr.mxu0 0.0
    %1665 = vmatpush2.msra.mxu0 0.0
    %1666 = vmatprep.subr.mxu0 0.0
    %1667 = vmatpush2.msra.mxu0 0.0
    %1668 = vmatprep.subr.mxu0 0.0
    %1669 = vmatpush2.msra.mxu0 0.0
    %1670 = vmatprep.subr.mxu0 0.0
    %1671 = vmatpush2.msra.mxu0 0.0
    %1672 = vmatprep.subr.mxu0 0.0
    %1673 = vmatpush2.msra.mxu0 0.0
    %1674 = vmatprep.subr.mxu0 0.0
    %1675 = vmatpush2.msra.mxu0 0.0
    %1676 = vmatprep.subr.mxu0 0.0
    %1677 = vmatpush2.msra.mxu0 0.0
    %1678 = vmatprep.subr.mxu0 0.0
    %1679 = vmatpush2.msra.mxu0 0.0
    %1680 = vmatprep.subr.mxu0 0.0
    %1681 = vmatpush2.msra.mxu0 0.0
    %1682 = vmatprep.subr.mxu0 0.0
    %1683 = vmatpush2.msra.mxu0 0.0
    %1684 = vmatprep.mubr.f32.mxu0 0.0
    %1685 = vmatmul.mubr.f32.gmra.mxu0 %v1615
    %v1686 = vpop.f32.mrf.mxu0
    %v1687 = vadd.f32 0.0, %v1686
    %v1688 = vpop.f32.mrf.mxu0
    %1689 = vmatprep.mubr.f32.mxu0 0.0
    %1690 = vmatmul.mubr.f32.gmra.mxu0 %v1618
    %v1691 = vpop.f32.mrf.mxu0
    %v1692 = vadd.f32 0.0, %v1691
    %v1693 = vpop.f32.mrf.mxu0
    %1694 = vdwg.mxu0
    %s1695 = scalar_lea.vmem %s8, 32
    %v1696 = vld [vmem:[%s1695] sm:$0xff]
    %v1697 = vld [vmem:[%s1695 + $0x8] sm:$0xff]
    %v1698 = vld [vmem:[%s1695 + $0x10] sm:$0xff]
    %v1699 = vld [vmem:[%s1695 + $0x18] sm:$0xff]
    %s1700 = scalar_lea.vmem %s9, 1
    %v1701 = vld [vmem:[%s1700] sm:$0x1]
    %v1703 = vlaneseq
    %v1704 = vshrl.u32 %v1703, 7
    %v1705 = vsub.s32 0, %v1704
    %v1706 = vrot.slane %v1701, %v1705
    %v1709 = vsel %vm322, %v1687, 0
    %v1712 = vsel %vm322, %v1692, 0
    %1714 = vmatprep.subr.mxu0 0.0
    %1715 = vmatpush1.msra.mxu0 0.0
    %1716 = vmatprep.subr.mxu0 0.0
    %1717 = vmatpush1.msra.mxu0 0.0
    %1718 = vmatprep.subr.mxu0 0.0
    %1719 = vmatpush1.msra.mxu0 0.0
    %1720 = vmatprep.subr.mxu0 0.0
    %1721 = vmatpush1.msra.mxu0 0.0
    %1722 = vmatprep.subr.mxu0 0.0
    %1723 = vmatpush1.msra.mxu0 0.0
    %1724 = vmatprep.subr.mxu0 0.0
    %1725 = vmatpush1.msra.mxu0 0.0
    %1726 = vmatprep.subr.mxu0 0.0
    %1727 = vmatpush1.msra.mxu0 0.0
    %1728 = vmatprep.subr.mxu0 0.0
    %1729 = vmatpush1.msra.mxu0 0.0
    %1730 = vmatprep.subr.mxu0 0.0
    %1731 = vmatpush1.msra.mxu0 0.0
    %1732 = vmatprep.subr.mxu0 0.0
    %1733 = vmatpush1.msra.mxu0 0.0
    %1734 = vmatprep.subr.mxu0 0.0
    %1735 = vmatpush1.msra.mxu0 0.0
    %1736 = vmatprep.subr.mxu0 0.0
    %1737 = vmatpush1.msra.mxu0 0.0
    %1738 = vmatprep.subr.mxu0 0.0
    %1739 = vmatpush1.msra.mxu0 %v1699
    %1740 = vmatprep.subr.mxu0 0.0
    %1741 = vmatpush1.msra.mxu0 %v1698
    %1742 = vmatprep.subr.mxu0 0.0
    %1743 = vmatpush1.msra.mxu0 %v1697
    %1744 = vmatprep.subr.mxu0 0.0
    %1745 = vmatpush1.msra.mxu0 %v1696
    %1746 = vmatprep.subr.mxu0 0.0
    %1747 = vmatpush2.msra.mxu0 0.0
    %1748 = vmatprep.subr.mxu0 0.0
    %1749 = vmatpush2.msra.mxu0 0.0
    %1750 = vmatprep.subr.mxu0 0.0
    %1751 = vmatpush2.msra.mxu0 0.0
    %1752 = vmatprep.subr.mxu0 0.0
    %1753 = vmatpush2.msra.mxu0 0.0
    %1754 = vmatprep.subr.mxu0 0.0
    %1755 = vmatpush2.msra.mxu0 0.0
    %1756 = vmatprep.subr.mxu0 0.0
    %1757 = vmatpush2.msra.mxu0 0.0
    %1758 = vmatprep.subr.mxu0 0.0
    %1759 = vmatpush2.msra.mxu0 0.0
    %1760 = vmatprep.subr.mxu0 0.0
    %1761 = vmatpush2.msra.mxu0 0.0
    %1762 = vmatprep.subr.mxu0 0.0
    %1763 = vmatpush2.msra.mxu0 0.0
    %1764 = vmatprep.subr.mxu0 0.0
    %1765 = vmatpush2.msra.mxu0 0.0
    %1766 = vmatprep.subr.mxu0 0.0
    %1767 = vmatpush2.msra.mxu0 0.0
    %1768 = vmatprep.subr.mxu0 0.0
    %1769 = vmatpush2.msra.mxu0 0.0
    %1770 = vmatprep.subr.mxu0 0.0
    %1771 = vmatpush2.msra.mxu0 0.0
    %1772 = vmatprep.subr.mxu0 0.0
    %1773 = vmatpush2.msra.mxu0 0.0
    %1774 = vmatprep.subr.mxu0 0.0
    %1775 = vmatpush2.msra.mxu0 0.0
    %1776 = vmatprep.subr.mxu0 0.0
    %1777 = vmatpush2.msra.mxu0 0.0
    %1778 = vmatprep.mubr.f32.mxu0 0.0
    %1779 = vmatmul.mubr.f32.gmra.mxu0 %v1709
    %v1780 = vpop.f32.mrf.mxu0
    %v1781 = vadd.f32 %v1706, %v1780
    %v1782 = vpop.f32.mrf.mxu0
    %1783 = vmatprep.mubr.f32.mxu0 0.0
    %1784 = vmatmul.mubr.f32.gmra.mxu0 %v1712
    %v1785 = vpop.f32.mrf.mxu0
    %v1786 = vadd.f32 %v1706, %v1785
    %v1787 = vpop.f32.mrf.mxu0
    %1788 = vdwg.mxu0
    %v1789 = vadd.f32 %v1252, %v1781
    %v1790 = vadd.f32 %v1253, %v1786
    %s1791 = scalar_lea.vmem [#allocation11], 1
    %v1792 = vld [vmem:[%s1791] sm:$0x1]
    %s1793 = scalar_lea.vmem [#allocation13], 1
    %v1794 = vld [vmem:[%s1793] sm:$0x1]
    %v1795 = vsel %vm322, %v1789, 0.0
    %1796 = vadd.xlane.f32.xlu0 %v1795
    %v1797 = vpop.xlane.xlu0 %1796
    %v1798 = vsel %vm322, %v1790, 0.0
    %1799 = vadd.xlane.f32.xlu0 %v1798
    %v1800 = vpop.xlane.xlu0 %1799
    %v1801 = vmul.f32 %v1797, %v329
    %v1802 = vmul.f32 %v1800, %v329
    %v1803 = vsub.f32 %v1789, %v1801
    %v1804 = vsub.f32 %v1790, %v1802
    %v1805 = vmul.f32 %v1803, %v1803
    %v1806 = vmul.f32 %v1804, %v1804
    %v1807 = vsel %vm322, %v1805, 0.0
    %1808 = vadd.xlane.f32.xlu0 %v1807
    %v1809 = vpop.xlane.xlu0 %1808
    %v1810 = vsel %vm322, %v1806, 0.0
    %1811 = vadd.xlane.f32.xlu0 %v1810
    %v1812 = vpop.xlane.xlu0 %1811
    %v1813 = vmul.f32 %v1809, %v329
    %v1814 = vmul.f32 %v1812, %v329
    %v1815 = vadd.f32 %v1813, 1e-05
    %v1816 = vadd.f32 %v1814, 1e-05
    %v1817 = vrsqrt.pop %v1815
    %v1818 = vrsqrt.pop %v1816
    %v1819 = vmul.f32 %v1803, %v1817
    %v1820 = vmul.f32 %v1804, %v1818
    %v1822 = vlaneseq
    %v1823 = vshrl.u32 %v1822, 7
    %v1824 = vsub.s32 0, %v1823
    %v1825 = vrot.slane %v1792, %v1824
    %v1827 = vmul.f32 %v1819, %v1825
    %v1828 = vmul.f32 %v1820, %v1825
    %v1830 = vlaneseq
    %v1831 = vshrl.u32 %v1830, 7
    %v1832 = vsub.s32 0, %v1831
    %v1833 = vrot.slane %v1794, %v1832
    %v1835 = vadd.f32 %v1827, %v1833
    %v1836 = vadd.f32 %v1828, %v1833
    %s1837 = scalar_lea.vmem %s12, 32
    %v1838 = vld [vmem:[%s1837] sm:$0xff]
    %v1839 = vld [vmem:[%s1837 + $0x8] sm:$0xff]
    %v1840 = vld [vmem:[%s1837 + $0x10] sm:$0xff]
    %v1841 = vld [vmem:[%s1837 + $0x18] sm:$0xff]
    %s1842 = scalar_lea.vmem [#allocation14], 1
    %v1843 = vld [vmem:[%s1842] sm:$0x1]
    %v1845 = vlaneseq
    %v1846 = vshrl.u32 %v1845, 7
    %v1847 = vsub.s32 0, %v1846
    %v1848 = vrot.slane %v1843, %v1847
    %v1851 = vsel %vm322, %v1835, 0
    %v1854 = vsel %vm322, %v1836, 0
    %1856 = vmatprep.subr.mxu0 0.0
    %1857 = vmatpush1.msra.mxu0 0.0
    %1858 = vmatprep.subr.mxu0 0.0
    %1859 = vmatpush1.msra.mxu0 0.0
    %1860 = vmatprep.subr.mxu0 0.0
    %1861 = vmatpush1.msra.mxu0 0.0
    %1862 = vmatprep.subr.mxu0 0.0
    %1863 = vmatpush1.msra.mxu0 0.0
    %1864 = vmatprep.subr.mxu0 0.0
    %1865 = vmatpush1.msra.mxu0 0.0
    %1866 = vmatprep.subr.mxu0 0.0
    %1867 = vmatpush1.msra.mxu0 0.0
    %1868 = vmatprep.subr.mxu0 0.0
    %1869 = vmatpush1.msra.mxu0 0.0
    %1870 = vmatprep.subr.mxu0 0.0
    %1871 = vmatpush1.msra.mxu0 0.0
    %1872 = vmatprep.subr.mxu0 0.0
    %1873 = vmatpush1.msra.mxu0 0.0
    %1874 = vmatprep.subr.mxu0 0.0
    %1875 = vmatpush1.msra.mxu0 0.0
    %1876 = vmatprep.subr.mxu0 0.0
    %1877 = vmatpush1.msra.mxu0 0.0
    %1878 = vmatprep.subr.mxu0 0.0
    %1879 = vmatpush1.msra.mxu0 0.0
    %1880 = vmatprep.subr.mxu0 0.0
    %1881 = vmatpush1.msra.mxu0 %v1841
    %1882 = vmatprep.subr.mxu0 0.0
    %1883 = vmatpush1.msra.mxu0 %v1840
    %1884 = vmatprep.subr.mxu0 0.0
    %1885 = vmatpush1.msra.mxu0 %v1839
    %1886 = vmatprep.subr.mxu0 0.0
    %1887 = vmatpush1.msra.mxu0 %v1838
    %1888 = vmatprep.subr.mxu0 0.0
    %1889 = vmatpush2.msra.mxu0 0.0
    %1890 = vmatprep.subr.mxu0 0.0
    %1891 = vmatpush2.msra.mxu0 0.0
    %1892 = vmatprep.subr.mxu0 0.0
    %1893 = vmatpush2.msra.mxu0 0.0
    %1894 = vmatprep.subr.mxu0 0.0
    %1895 = vmatpush2.msra.mxu0 0.0
    %1896 = vmatprep.subr.mxu0 0.0
    %1897 = vmatpush2.msra.mxu0 0.0
    %1898 = vmatprep.subr.mxu0 0.0
    %1899 = vmatpush2.msra.mxu0 0.0
    %1900 = vmatprep.subr.mxu0 0.0
    %1901 = vmatpush2.msra.mxu0 0.0
    %1902 = vmatprep.subr.mxu0 0.0
    %1903 = vmatpush2.msra.mxu0 0.0
    %1904 = vmatprep.subr.mxu0 0.0
    %1905 = vmatpush2.msra.mxu0 0.0
    %1906 = vmatprep.subr.mxu0 0.0
    %1907 = vmatpush2.msra.mxu0 0.0
    %1908 = vmatprep.subr.mxu0 0.0
    %1909 = vmatpush2.msra.mxu0 0.0
    %1910 = vmatprep.subr.mxu0 0.0
    %1911 = vmatpush2.msra.mxu0 0.0
    %1912 = vmatprep.subr.mxu0 0.0
    %1913 = vmatpush2.msra.mxu0 0.0
    %1914 = vmatprep.subr.mxu0 0.0
    %1915 = vmatpush2.msra.mxu0 0.0
    %1916 = vmatprep.subr.mxu0 0.0
    %1917 = vmatpush2.msra.mxu0 0.0
    %1918 = vmatprep.subr.mxu0 0.0
    %1919 = vmatpush2.msra.mxu0 0.0
    %1920 = vmatprep.mubr.f32.mxu0 0.0
    %1921 = vmatmul.mubr.f32.gmra.mxu0 %v1851
    %v1922 = vpop.f32.mrf.mxu0
    %v1923 = vadd.f32 %v1848, %v1922
    %v1924 = vpop.f32.mrf.mxu0
    %1925 = vmatprep.mubr.f32.mxu0 0.0
    %1926 = vmatmul.mubr.f32.gmra.mxu0 %v1854
    %v1927 = vpop.f32.mrf.mxu0
    %v1928 = vadd.f32 %v1848, %v1927
    %v1929 = vpop.f32.mrf.mxu0
    %1930 = vdwg.mxu0
    %v1931 = vmax.f32 %v1923, 0.0
    %v1932 = vmax.f32 %v1928, 0.0
    %s1933 = scalar_lea.vmem %s14, 64
    %v1934 = vld [vmem:[%s1933] sm:$0xff]
    %v1935 = vld [vmem:[%s1933 + $0x8] sm:$0xff]
    %v1936 = vld [vmem:[%s1933 + $0x10] sm:$0xff]
    %v1937 = vld [vmem:[%s1933 + $0x18] sm:$0xff]
    %v1938 = vld [vmem:[%s1933 + $0x20] sm:$0xff]
    %v1939 = vld [vmem:[%s1933 + $0x28] sm:$0xff]
    %v1940 = vld [vmem:[%s1933 + $0x30] sm:$0xff]
    %v1941 = vld [vmem:[%s1933 + $0x38] sm:$0xff]
    %s1942 = scalar_lea.vmem [#allocation16], 1
    %v1943 = vld [vmem:[%s1942] sm:$0x1]
    %v1945 = vlaneseq
    %v1946 = vshrl.u32 %v1945, 7
    %v1947 = vsub.s32 0, %v1946
    %v1948 = vrot.slane %v1943, %v1947
    %v1951 = vsel %vm669, %v1931, 0
    %v1954 = vsel %vm669, %v1932, 0
    %1956 = vmatprep.subr.mxu0 0.0
    %1957 = vmatpush1.msra.mxu0 0.0
    %1958 = vmatprep.subr.mxu0 0.0
    %1959 = vmatpush1.msra.mxu0 0.0
    %1960 = vmatprep.subr.mxu0 0.0
    %1961 = vmatpush1.msra.mxu0 0.0
    %1962 = vmatprep.subr.mxu0 0.0
    %1963 = vmatpush1.msra.mxu0 0.0
    %1964 = vmatprep.subr.mxu0 0.0
    %1965 = vmatpush1.msra.mxu0 0.0
    %1966 = vmatprep.subr.mxu0 0.0
    %1967 = vmatpush1.msra.mxu0 0.0
    %1968 = vmatprep.subr.mxu0 0.0
    %1969 = vmatpush1.msra.mxu0 0.0
    %1970 = vmatprep.subr.mxu0 0.0
    %1971 = vmatpush1.msra.mxu0 0.0
    %1972 = vmatprep.subr.mxu0 0.0
    %1973 = vmatpush1.msra.mxu0 %v1941
    %1974 = vmatprep.subr.mxu0 0.0
    %1975 = vmatpush1.msra.mxu0 %v1940
    %1976 = vmatprep.subr.mxu0 0.0
    %1977 = vmatpush1.msra.mxu0 %v1939
    %1978 = vmatprep.subr.mxu0 0.0
    %1979 = vmatpush1.msra.mxu0 %v1938
    %1980 = vmatprep.subr.mxu0 0.0
    %1981 = vmatpush1.msra.mxu0 %v1937
    %1982 = vmatprep.subr.mxu0 0.0
    %1983 = vmatpush1.msra.mxu0 %v1936
    %1984 = vmatprep.subr.mxu0 0.0
    %1985 = vmatpush1.msra.mxu0 %v1935
    %1986 = vmatprep.subr.mxu0 0.0
    %1987 = vmatpush1.msra.mxu0 %v1934
    %1988 = vmatprep.subr.mxu0 0.0
    %1989 = vmatpush2.msra.mxu0 0.0
    %1990 = vmatprep.subr.mxu0 0.0
    %1991 = vmatpush2.msra.mxu0 0.0
    %1992 = vmatprep.subr.mxu0 0.0
    %1993 = vmatpush2.msra.mxu0 0.0
    %1994 = vmatprep.subr.mxu0 0.0
    %1995 = vmatpush2.msra.mxu0 0.0
    %1996 = vmatprep.subr.mxu0 0.0
    %1997 = vmatpush2.msra.mxu0 0.0
    %1998 = vmatprep.subr.mxu0 0.0
    %1999 = vmatpush2.msra.mxu0 0.0
    %2000 = vmatprep.subr.mxu0 0.0
    %2001 = vmatpush2.msra.mxu0 0.0
    %2002 = vmatprep.subr.mxu0 0.0
    %2003 = vmatpush2.msra.mxu0 0.0
    %2004 = vmatprep.subr.mxu0 0.0
    %2005 = vmatpush2.msra.mxu0 0.0
    %2006 = vmatprep.subr.mxu0 0.0
    %2007 = vmatpush2.msra.mxu0 0.0
    %2008 = vmatprep.subr.mxu0 0.0
    %2009 = vmatpush2.msra.mxu0 0.0
    %2010 = vmatprep.subr.mxu0 0.0
    %2011 = vmatpush2.msra.mxu0 0.0
    %2012 = vmatprep.subr.mxu0 0.0
    %2013 = vmatpush2.msra.mxu0 0.0
    %2014 = vmatprep.subr.mxu0 0.0
    %2015 = vmatpush2.msra.mxu0 0.0
    %2016 = vmatprep.subr.mxu0 0.0
    %2017 = vmatpush2.msra.mxu0 0.0
    %2018 = vmatprep.subr.mxu0 0.0
    %2019 = vmatpush2.msra.mxu0 0.0
    %2020 = vmatprep.mubr.f32.mxu0 0.0
    %2021 = vmatmul.mubr.f32.gmra.mxu0 %v1951
    %v2022 = vpop.f32.mrf.mxu0
    %v2023 = vadd.f32 %v1948, %v2022
    %v2024 = vpop.f32.mrf.mxu0
    %2025 = vmatprep.mubr.f32.mxu0 0.0
    %2026 = vmatmul.mubr.f32.gmra.mxu0 %v1954
    %v2027 = vpop.f32.mrf.mxu0
    %v2028 = vadd.f32 %v1948, %v2027
    %v2029 = vpop.f32.mrf.mxu0
    %2030 = vdwg.mxu0
    %v2031 = vadd.f32 %v1835, %v2023
    %v2032 = vadd.f32 %v1836, %v2028
    %s2033 = scalar_lea.vmem [#allocation17], 1
    %v2034 = vld [vmem:[%s2033] sm:$0x1]
    %s2035 = scalar_lea.vmem [#allocation19], 1
    %v2036 = vld [vmem:[%s2035] sm:$0x1]
    %v2037 = vsel %vm322, %v2031, 0.0
    %2038 = vadd.xlane.f32.xlu0 %v2037
    %v2039 = vpop.xlane.xlu0 %2038
    %v2040 = vsel %vm322, %v2032, 0.0
    %2041 = vadd.xlane.f32.xlu0 %v2040
    %v2042 = vpop.xlane.xlu0 %2041
    %v2043 = vmul.f32 %v2039, %v329
    %v2044 = vmul.f32 %v2042, %v329
    %v2045 = vsub.f32 %v2031, %v2043
    %v2046 = vsub.f32 %v2032, %v2044
    %v2047 = vmul.f32 %v2045, %v2045
    %v2048 = vmul.f32 %v2046, %v2046
    %v2049 = vsel %vm322, %v2047, 0.0
    %2050 = vadd.xlane.f32.xlu0 %v2049
    %v2051 = vpop.xlane.xlu0 %2050
    %v2052 = vsel %vm322, %v2048, 0.0
    %2053 = vadd.xlane.f32.xlu0 %v2052
    %v2054 = vpop.xlane.xlu0 %2053
    %v2055 = vmul.f32 %v2051, %v329
    %v2056 = vmul.f32 %v2054, %v329
    %v2057 = vadd.f32 %v2055, 1e-05
    %v2058 = vadd.f32 %v2056, 1e-05
    %v2059 = vrsqrt.pop %v2057
    %v2060 = vrsqrt.pop %v2058
    %v2061 = vmul.f32 %v2045, %v2059
    %v2062 = vmul.f32 %v2046, %v2060
    %v2064 = vlaneseq
    %v2065 = vshrl.u32 %v2064, 7
    %v2066 = vsub.s32 0, %v2065
    %v2067 = vrot.slane %v2034, %v2066
    %v2069 = vmul.f32 %v2061, %v2067
    %v2070 = vmul.f32 %v2062, %v2067
    %v2072 = vlaneseq
    %v2073 = vshrl.u32 %v2072, 7
    %v2074 = vsub.s32 0, %v2073
    %v2075 = vrot.slane %v2036, %v2074
    %v2077 = vadd.f32 %v2069, %v2075
    %v2078 = vadd.f32 %v2070, %v2075
    %v2079 = vld [vmem:[%s23] sm:$0x3]
    %vm2080 = vcmask 130048
    %v2082 = vsel %vm2080, %v2079, 0
    %2084 = vmatprep.subr.mxu0 0.0
    %2085 = vmatpush1.msra.mxu0 0.0
    %2086 = vmatprep.subr.mxu0 0.0
    %2087 = vmatpush1.msra.mxu0 0.0
    %2088 = vmatprep.subr.mxu0 0.0
    %2089 = vmatpush1.msra.mxu0 0.0
    %2090 = vmatprep.subr.mxu0 0.0
    %2091 = vmatpush1.msra.mxu0 0.0
    %2092 = vmatprep.subr.mxu0 0.0
    %2093 = vmatpush1.msra.mxu0 0.0
    %2094 = vmatprep.subr.mxu0 0.0
    %2095 = vmatpush1.msra.mxu0 0.0
    %2096 = vmatprep.subr.mxu0 0.0
    %2097 = vmatpush1.msra.mxu0 0.0
    %2098 = vmatprep.subr.mxu0 0.0
    %2099 = vmatpush1.msra.mxu0 0.0
    %2100 = vmatprep.subr.mxu0 0.0
    %2101 = vmatpush1.msra.mxu0 0.0
    %2102 = vmatprep.subr.mxu0 0.0
    %2103 = vmatpush1.msra.mxu0 0.0
    %2104 = vmatprep.subr.mxu0 0.0
    %2105 = vmatpush1.msra.mxu0 0.0
    %2106 = vmatprep.subr.mxu0 0.0
    %2107 = vmatpush1.msra.mxu0 0.0
    %2108 = vmatprep.subr.mxu0 0.0
    %2109 = vmatpush1.msra.mxu0 0.0
    %2110 = vmatprep.subr.mxu0 0.0
    %2111 = vmatpush1.msra.mxu0 0.0
    %2112 = vmatprep.subr.mxu0 0.0
    %2113 = vmatpush1.msra.mxu0 %v2078
    %2114 = vmatprep.subr.mxu0 0.0
    %2115 = vmatpush1.msra.mxu0 %v2077
    %2116 = vmatprep.subr.mxu0 0.0
    %2117 = vmatpush2.msra.mxu0 0.0
    %2118 = vmatprep.subr.mxu0 0.0
    %2119 = vmatpush2.msra.mxu0 0.0
    %2120 = vmatprep.subr.mxu0 0.0
    %2121 = vmatpush2.msra.mxu0 0.0
    %2122 = vmatprep.subr.mxu0 0.0
    %2123 = vmatpush2.msra.mxu0 0.0
    %2124 = vmatprep.subr.mxu0 0.0
    %2125 = vmatpush2.msra.mxu0 0.0
    %2126 = vmatprep.subr.mxu0 0.0
    %2127 = vmatpush2.msra.mxu0 0.0
    %2128 = vmatprep.subr.mxu0 0.0
    %2129 = vmatpush2.msra.mxu0 0.0
    %2130 = vmatprep.subr.mxu0 0.0
    %2131 = vmatpush2.msra.mxu0 0.0
    %2132 = vmatprep.subr.mxu0 0.0
    %2133 = vmatpush2.msra.mxu0 0.0
    %2134 = vmatprep.subr.mxu0 0.0
    %2135 = vmatpush2.msra.mxu0 0.0
    %2136 = vmatprep.subr.mxu0 0.0
    %2137 = vmatpush2.msra.mxu0 0.0
    %2138 = vmatprep.subr.mxu0 0.0
    %2139 = vmatpush2.msra.mxu0 0.0
    %2140 = vmatprep.subr.mxu0 0.0
    %2141 = vmatpush2.msra.mxu0 0.0
    %2142 = vmatprep.subr.mxu0 0.0
    %2143 = vmatpush2.msra.mxu0 0.0
    %2144 = vmatprep.subr.mxu0 0.0
    %2145 = vmatpush2.msra.mxu0 0.0
    %2146 = vmatprep.subr.mxu0 0.0
    %2147 = vmatpush2.msra.mxu0 0.0
    %2148 = vmatprep.mubr.f32.mxu0 0.0
    %2149 = vmatmul.mubr.f32.gmra.mxu0 %v2082
    %v2150 = vpop.f32.mrf.mxu0
    %v2151 = vadd.f32 0.0, %v2150
    %v2152 = vpop.f32.mrf.mxu0
    %2153 = vdwg.mxu0
    %v2154 = vld [vmem:[%s18] sm:$0xff]
    %v2155 = vld [vmem:[%s18 + $0x8] sm:$0xff]
    %v2156 = vld [vmem:[%s18 + $0x10] sm:$0xff]
    %v2157 = vld [vmem:[%s18 + $0x18] sm:$0xff]
    %v2158 = vld [vmem:[#allocation2] sm:$0x1]
    %v2160 = vlaneseq
    %v2161 = vshrl.u32 %v2160, 7
    %v2162 = vsub.s32 0, %v2161
    %v2163 = vrot.slane %v2158, %v2162
    %v2166 = vsel %vm322, %v2151, 0
    %2168 = vmatprep.subr.mxu0 0.0
    %2169 = vmatpush1.msra.mxu0 0.0
    %2170 = vmatprep.subr.mxu0 0.0
    %2171 = vmatpush1.msra.mxu0 0.0
    %2172 = vmatprep.subr.mxu0 0.0
    %2173 = vmatpush1.msra.mxu0 0.0
    %2174 = vmatprep.subr.mxu0 0.0
    %2175 = vmatpush1.msra.mxu0 0.0
    %2176 = vmatprep.subr.mxu0 0.0
    %2177 = vmatpush1.msra.mxu0 0.0
    %2178 = vmatprep.subr.mxu0 0.0
    %2179 = vmatpush1.msra.mxu0 0.0
    %2180 = vmatprep.subr.mxu0 0.0
    %2181 = vmatpush1.msra.mxu0 0.0
    %2182 = vmatprep.subr.mxu0 0.0
    %2183 = vmatpush1.msra.mxu0 0.0
    %2184 = vmatprep.subr.mxu0 0.0
    %2185 = vmatpush1.msra.mxu0 0.0
    %2186 = vmatprep.subr.mxu0 0.0
    %2187 = vmatpush1.msra.mxu0 0.0
    %2188 = vmatprep.subr.mxu0 0.0
    %2189 = vmatpush1.msra.mxu0 0.0
    %2190 = vmatprep.subr.mxu0 0.0
    %2191 = vmatpush1.msra.mxu0 0.0
    %2192 = vmatprep.subr.mxu0 0.0
    %2193 = vmatpush1.msra.mxu0 %v2157
    %2194 = vmatprep.subr.mxu0 0.0
    %2195 = vmatpush1.msra.mxu0 %v2156
    %2196 = vmatprep.subr.mxu0 0.0
    %2197 = vmatpush1.msra.mxu0 %v2155
    %2198 = vmatprep.subr.mxu0 0.0
    %2199 = vmatpush1.msra.mxu0 %v2154
    %2200 = vmatprep.subr.mxu0 0.0
    %2201 = vmatpush2.msra.mxu0 0.0
    %2202 = vmatprep.subr.mxu0 0.0
    %2203 = vmatpush2.msra.mxu0 0.0
    %2204 = vmatprep.subr.mxu0 0.0
    %2205 = vmatpush2.msra.mxu0 0.0
    %2206 = vmatprep.subr.mxu0 0.0
    %2207 = vmatpush2.msra.mxu0 0.0
    %2208 = vmatprep.subr.mxu0 0.0
    %2209 = vmatpush2.msra.mxu0 0.0
    %2210 = vmatprep.subr.mxu0 0.0
    %2211 = vmatpush2.msra.mxu0 0.0
    %2212 = vmatprep.subr.mxu0 0.0
    %2213 = vmatpush2.msra.mxu0 0.0
    %2214 = vmatprep.subr.mxu0 0.0
    %2215 = vmatpush2.msra.mxu0 0.0
    %2216 = vmatprep.subr.mxu0 0.0
    %2217 = vmatpush2.msra.mxu0 0.0
    %2218 = vmatprep.subr.mxu0 0.0
    %2219 = vmatpush2.msra.mxu0 0.0
    %2220 = vmatprep.subr.mxu0 0.0
    %2221 = vmatpush2.msra.mxu0 0.0
    %2222 = vmatprep.subr.mxu0 0.0
    %2223 = vmatpush2.msra.mxu0 0.0
    %2224 = vmatprep.subr.mxu0 0.0
    %2225 = vmatpush2.msra.mxu0 0.0
    %2226 = vmatprep.subr.mxu0 0.0
    %2227 = vmatpush2.msra.mxu0 0.0
    %2228 = vmatprep.subr.mxu0 0.0
    %2229 = vmatpush2.msra.mxu0 0.0
    %2230 = vmatprep.subr.mxu0 0.0
    %2231 = vmatpush2.msra.mxu0 0.0
    %2232 = vmatprep.mubr.f32.mxu0 0.0
    %2233 = vmatmul.mubr.f32.gmra.mxu0 %v2166
    %v2234 = vpop.f32.mrf.mxu0
    %v2235 = vadd.f32 %v2163, %v2234
    %v2236 = vpop.f32.mrf.mxu0
    %2237 = vdwg.mxu0
    %v2238 = vxor.u32 %v2235, 2147483648
    %v2239 = vmul.f32 %v2238, 1.442695
    %v2240 = vpow.pop %v2239
    %v2241 = vadd.f32 %v2240, 1.0
    %v2242 = vrcp.pop %v2241
    %v2243 = vmul.f32 1.0, %v2242
    %vm2244 = vcmask 1024
    %2245 = vst.msk [vmem:[%s24] sm:$0x3] %vm2244, %v2243
    // Predicated region
    $region142: #{tpu_custom_call.1} parent=1 // pred_check
      _
    $region143: #{tpu_custom_call.1} parent=1 // pred_check_branch
      %2247 = sbr.rel (0) target = $region145
    $region144: #{tpu_custom_call.1} parent=1 // pred_region
      _
    $region145: #{tpu_custom_call.1} parent=1 // pred_fallthru
      _
    // Predicated region
    $region146: #{tpu_custom_call.1} parent=1 // pred_check
      _
    $region147: #{tpu_custom_call.1} parent=1 // pred_check_branch
      %2249 = sbr.rel (0) target = $region149
    $region148: #{tpu_custom_call.1} parent=1 // pred_region
      _
    $region149: #{tpu_custom_call.1} parent=1 // pred_fallthru
      _
    %2250 = vsyncpa [#allocation4], 1
    %2251 = vsyncpa [#allocation6], 1
    %2252 = vsyncpa [#allocation9], 1
    %2253 = vsyncpa [#allocation12], 1
    %2254 = vsyncpa [#allocation15], 1
    %2255 = vsyncpa [#allocation18], 1

</llo_original>
